<compile_context>
chip_gen: v5e
topology: v5e:2x2
jax: 0.10.0
libtpu: 0.0.40
codegen_flags: <defaults>
</compile_context>

<pallas_src>
import jax
import jax.numpy as jnp
from jax.experimental import pallas as pl
from jax.experimental.pallas import tpu as pltpu


def _f32(v):
    # Cast only when needed (avoid no-op convert_element_type on f32 inputs).
    return v if v.dtype == jnp.float32 else v.astype(jnp.float32)


def tgm_trm_kernel(x_ref, w1_ref, w2_ref, w3_ref, lam_ref, o_ref):
    # x_ref / o_ref : (bt, C, H*W)  lane-dense slab (H*W on lanes)
    # w1_ref        : (C*R, C)   with w1_ref[o*R + r, i] = W1[r, o, i]
    # w2_ref        : (R*H, H)   with w2_ref[r*H + o, i] = W2[r, o, i]
    # w3_ref        : (R*H, H)   with w3_ref[r*H + o, i] = W3[r, o, i]
    # lam_ref       : (1, R)
    bt, c, hw = x_ref.shape
    h = w2_ref.shape[1]
    w = hw // h
    rank = lam_ref.shape[1]

    xb = x_ref[...]
    xf = _f32(xb)                                   # (bt, C, HW)

    # softmax over the lambda mixing weights (shared by all images)
    # TODO(synk): PyTorch overwrites self.lam in-place with softmax(self.lam)
    # across forward calls (stateful quirk); here softmax is applied
    # functionally per call (matches the first PyTorch forward).
    lam = jax.nn.softmax(_f32(lam_ref[...]), axis=-1)          # (1, R)

    # ---- global average pools for the whole batch tile (no per-image loop) --
    cpool = jnp.mean(xf, axis=2)                   # (bt, C)   lane reduce
    m = jnp.mean(xf, axis=1)                       # (bt, HW)  sublane reduce
    mhw = m.reshape(bt, h, w)                      # (bt, H, W): one tile-crossing relayout per tile
    wpool = jnp.mean(mhw, axis=2)                  # (bt, H)   mean over C,W (indexed by height)
    hpool = jnp.mean(mhw, axis=1)                  # (bt, W)   mean over C,H (indexed by width)

    # ---- 1x1 convs + sigmoid on the VPU: sublane-broadcast + lane reduce ----
    # Weights carry the conv INPUT index along lanes, so the pooled rows are
    # consumed directly (no lane->sublane transpose of hpool/wpool/cpool).
    def conv_sig(wrow, pooled):
        prod = wrow[None, :, :] * pooled[:, None, :]           # (bt, Nout, Nin)
        return jax.nn.sigmoid(jnp.sum(prod, axis=-1))          # (bt, Nout)

    sigC = conv_sig(_f32(w1_ref[...]), cpool)      # (bt, C*R)  layout [o*R + r]
    sigH = conv_sig(_f32(w2_ref[...]), hpool)      # (bt, R*H)  layout [r*H + o]
    sigW = conv_sig(_f32(w3_ref[...]), wpool)      # (bt, R*H)  layout [r*H + o]

    # lambda folded into the channel factor
    a_all = sigC.reshape(bt, c, rank) * lam.reshape(1, 1, rank)    # (bt, C, R)
    sh = sigH.reshape(bt, rank, h)                                 # (bt, R, H) height factor
    sw = sigW.reshape(bt, rank, h)                                 # (bt, R, W) width factor
    # (bt, R, H, W) -> (bt, R, HW): single tile-crossing relayout per tile
    bmat = (sh[:, :, :, None] * sw[:, :, None, :]).reshape(bt, rank, hw)

    # ---- Tucker reconstruction as `rank` unrolled VPU FMAs (no MXU trip) ----
    t3 = a_all[:, :, 0:1] * bmat[:, 0:1, :]                        # (bt, C, HW)
    for r in range(1, rank):                                       # static, rank is tiny
        t3 = t3 + a_all[:, :, r:r + 1] * bmat[:, r:r + 1, :]

    # ---- out = x + relu(x * t); full-slab, full-lane unmasked stores --------
    y = xf + jnp.maximum(xf * t3, 0.0)
    o_ref[...] = y if y.dtype == o_ref.dtype else y.astype(o_ref.dtype)


def tgm_trm(x, w1, w2, w3, lam):
    """x: (B, C, H, W); w1: (R, C, C); w2, w3: (R, H, H); lam: (R,)."""
    b, c, h, w = x.shape
    rank = lam.shape[0]
    assert h == w, "module requires square spatial dims (height == width == h)"
    hw = h * w

    # Lane-dense 3-D slab: (B, C, H, W) -> (B, C, H*W).  HW (multiple of 128)
    # stays the last dim so elementwise work and stores are unmasked full-lane.
    x3 = x.reshape(b, c, hw)

    # Pre-layout the 1x1-conv weights with the conv INPUT index along lanes so
    # the in-kernel matvecs reduce over lanes and consume pooled rows directly.
    w1k = jnp.transpose(w1, (1, 0, 2)).reshape(c * rank, c)    # [o*R + r, i] = W1[r, o, i]
    w2k = w2.reshape(rank * h, h)                              # [r*H + o, i] = W2[r, o, i]
    w3k = w3.reshape(rank * h, h)                              # [r*H + o, i] = W3[r, o, i]
    lam2 = lam.reshape(1, rank)

    # Batch tiling: whole batch in one grid step on single-TC parts (v5e/v6e);
    # split over two parallel grid steps on dual-TensorCore v7x.
    # If B*C*HW scales up, shrink bt so ~4x the block bytes fits scoped VMEM
    # (16 MiB default on v5e, 32 MiB on v6e/v7x) or raise vmem_limit_bytes.
    kind = ""
    try:
        kind = jax.devices()[0].device_kind.lower()
    except Exception:
        pass
    bt = b // 2 if ("v7" in kind and b >= 2 and b % 2 == 0) else b
    grid = (b // bt,)

    itemsize = jnp.dtype(x.dtype).itemsize
    flops = b * (2 * rank * c * hw                 # reconstruction FMAs
                 + 5 * c * hw                      # pools + x*t + relu + add
                 + 2 * (rank * c * c + 2 * rank * h * h))   # small matvecs
    transcendentals = b * rank * (c + 2 * h) + rank
    bytes_accessed = (2 * b * c * hw * itemsize
                      + 4 * (rank * c * c + 2 * rank * h * h + rank))

    out3 = pl.pallas_call(
        tgm_trm_kernel,
        out_shape=jax.ShapeDtypeStruct((b, c, hw), x.dtype),
        grid=grid,
        in_specs=[
            pl.BlockSpec((bt, c, hw), lambda i: (i, 0, 0)),
            pl.BlockSpec((c * rank, c), lambda i: (0, 0)),
            pl.BlockSpec((rank * h, h), lambda i: (0, 0)),
            pl.BlockSpec((rank * h, h), lambda i: (0, 0)),
            pl.BlockSpec((1, rank), lambda i: (0, 0)),
        ],
        out_specs=pl.BlockSpec((bt, c, hw), lambda i: (i, 0, 0)),
        compiler_params=pltpu.CompilerParams(
            dimension_semantics=("parallel",)),
        cost_estimate=pl.CostEstimate(
            flops=flops,
            transcendentals=transcendentals,
            bytes_accessed=bytes_accessed),
    )(x3, w1k, w2k, w3k, lam2)

    return out3.reshape(b, c, h, w)


def reference(x, w1, w2, w3, lam):
    """Pure-jnp reference mirroring the PyTorch forward."""
    cpool = x.mean(axis=(2, 3))                    # (B, C)
    hpool = x.mean(axis=(1, 2))                    # (B, W)
    wpool = x.mean(axis=(1, 3))                    # (B, H)
    lam_s = jax.nn.softmax(lam, axis=-1)           # (R,)
    sigC = jax.nn.sigmoid(jnp.einsum('roi,bi->bro', w1, cpool))
    sigH = jax.nn.sigmoid(jnp.einsum('roi,bi->bro', w2, hpool))
    sigW = jax.nn.sigmoid(jnp.einsum('roi,bi->bro', w3, wpool))
    t = jnp.einsum('r,bri,brj,brk->bijk', lam_s, sigC, sigH, sigW)
    return x + jax.nn.relu(x * t)


def kaiming_fan_out(key, out_ch, in_ch):
    # nn.init.kaiming_normal_(mode='fan_out') for a 1x1 conv: std = sqrt(2 / out_ch)
    std = (2.0 / out_ch) ** 0.5
    return std * jax.random.normal(key, (out_ch, in_ch), dtype=jnp.float32)


if __name__ == "__main__":
    B, C, Hdim, RANK = 2, 8, 16, 3      # x: (B, C, h, h) with h == Hdim

    key = jax.random.PRNGKey(0)
    kx, k1, k2, k3 = jax.random.split(key, 4)

    x = jax.random.normal(kx, (B, C, Hdim, Hdim), dtype=jnp.float32)

    # rank stacks of 1x1 conv weights (bias=False), kaiming_normal fan_out init
    w1 = jnp.stack([kaiming_fan_out(k, C, C)
                    for k in jax.random.split(k1, RANK)])        # (R, C, C)
    w2 = jnp.stack([kaiming_fan_out(k, Hdim, Hdim)
                    for k in jax.random.split(k2, RANK)])        # (R, H, H)
    w3 = jnp.stack([kaiming_fan_out(k, Hdim, Hdim)
                    for k in jax.random.split(k3, RANK)])        # (R, H, H)
    lam = jnp.ones((RANK,), dtype=jnp.float32)                   # torch.ones(rank)

    out = jax.block_until_ready(tgm_trm(x, w1, w2, w3, lam))

    ref = reference(x, w1, w2, w3, lam)
    assert out.shape == ref.shape and out.dtype == ref.dtype
    assert jnp.allclose(out, ref, rtol=1e-4, atol=1e-4), "mismatch vs reference"

    print("KERNEL_OK")
</pallas_src>

<mosaic_0001>
module attributes {stable_mosaic.version = 11 : i64} {
  func.func @tgm_trm_kernel(%arg0: i32, %arg1: memref<2x8x256xf32, #tpu.memory_space<vmem>>, %arg2: memref<24x8xf32, #tpu.memory_space<vmem>>, %arg3: memref<48x16xf32, #tpu.memory_space<vmem>>, %arg4: memref<48x16xf32, #tpu.memory_space<vmem>>, %arg5: memref<1x3xf32, #tpu.memory_space<vmem>>, %arg6: memref<2x8x256xf32, #tpu.memory_space<vmem>>) attributes {dimension_semantics = [#tpu.dimension_semantics<parallel>], iteration_bounds = array<i64: 1>, scalar_prefetch = 0 : i64, scratch_operands = 0 : i64, tpu.core_type = #tpu.core_type<tc>, window_params = [{transform_indices = @transform_0, window_bounds = array<i64: 2, 8, 256>}, {pipeline_mode = #tpu.pipeline_mode<synchronous>, transform_indices = @transform_1, window_bounds = array<i64: 24, 8>}, {pipeline_mode = #tpu.pipeline_mode<synchronous>, transform_indices = @transform_2, window_bounds = array<i64: 48, 16>}, {pipeline_mode = #tpu.pipeline_mode<synchronous>, transform_indices = @transform_3, window_bounds = array<i64: 48, 16>}, {pipeline_mode = #tpu.pipeline_mode<synchronous>, transform_indices = @transform_4, window_bounds = array<i64: 1, 3>}, {transform_indices = @transform_5, window_bounds = array<i64: 2, 8, 256>}]} {
    %c0 = arith.constant 0 : index
    %c0_0 = arith.constant 0 : index
    %c0_1 = arith.constant 0 : index
    %0 = vector.load %arg1[%c0, %c0_0, %c0_1] : memref<2x8x256xf32, #tpu.memory_space<vmem>>, vector<2x8x256xf32>
    %c0_2 = arith.constant 0 : index
    %c0_3 = arith.constant 0 : index
    %1 = vector.load %arg5[%c0_2, %c0_3] : memref<1x3xf32, #tpu.memory_space<vmem>>, vector<1x3xf32>
    %cst = arith.constant dense<0xFF800000> : vector<1xf32>
    %2 = vector.multi_reduction <maximumf>, %1, %cst [1] : vector<1x3xf32> to vector<1xf32>
    %cst_4 = arith.constant 0xFF800000 : f32
    %3 = vector.broadcast %cst_4 : f32 to vector<1xf32>
    %4 = arith.maximumf %3, %2 : vector<1xf32>
    %5 = vector.shape_cast %4 : vector<1xf32> to vector<1x1xf32>
    %6 = vector.broadcast %5 : vector<1x1xf32> to vector<1x3xf32>
    %7 = arith.subf %1, %6 : vector<1x3xf32>
    %8 = math.exp %7 : vector<1x3xf32>
    %cst_5 = arith.constant dense<0.000000e+00> : vector<1xf32>
    %9 = vector.multi_reduction <add>, %8, %cst_5 [1] : vector<1x3xf32> to vector<1xf32>
    %10 = vector.shape_cast %9 : vector<1xf32> to vector<1x1xf32>
    %11 = vector.broadcast %10 : vector<1x1xf32> to vector<1x3xf32>
    %12 = arith.divf %8, %11 : vector<1x3xf32>
    %cst_6 = arith.constant dense<0.000000e+00> : vector<2x8xf32>
    %13 = vector.multi_reduction <add>, %0, %cst_6 [2] : vector<2x8x256xf32> to vector<2x8xf32>
    %cst_7 = arith.constant 2.560000e+02 : f32
    %14 = vector.broadcast %cst_7 : f32 to vector<2x8xf32>
    %15 = arith.divf %13, %14 : vector<2x8xf32>
    %cst_8 = arith.constant dense<0.000000e+00> : vector<2x256xf32>
    %16 = vector.multi_reduction <add>, %0, %cst_8 [1] : vector<2x8x256xf32> to vector<2x256xf32>
    %cst_9 = arith.constant 8.000000e+00 : f32
    %17 = vector.broadcast %cst_9 : f32 to vector<2x256xf32>
    %18 = arith.divf %16, %17 : vector<2x256xf32>
    %19 = vector.shape_cast %18 : vector<2x256xf32> to vector<2x16x16xf32>
    %cst_10 = arith.constant dense<0.000000e+00> : vector<2x16xf32>
    %20 = vector.multi_reduction <add>, %19, %cst_10 [2] : vector<2x16x16xf32> to vector<2x16xf32>
    %cst_11 = arith.constant 1.600000e+01 : f32
    %21 = vector.broadcast %cst_11 : f32 to vector<2x16xf32>
    %22 = arith.divf %20, %21 : vector<2x16xf32>
    %cst_12 = arith.constant dense<0.000000e+00> : vector<2x16xf32>
    %23 = vector.multi_reduction <add>, %19, %cst_12 [1] : vector<2x16x16xf32> to vector<2x16xf32>
    %cst_13 = arith.constant 1.600000e+01 : f32
    %24 = vector.broadcast %cst_13 : f32 to vector<2x16xf32>
    %25 = arith.divf %23, %24 : vector<2x16xf32>
    %c0_14 = arith.constant 0 : index
    %c0_15 = arith.constant 0 : index
    %26 = vector.load %arg2[%c0_14, %c0_15] : memref<24x8xf32, #tpu.memory_space<vmem>>, vector<24x8xf32>
    %27 = vector.shape_cast %26 : vector<24x8xf32> to vector<1x24x8xf32>
    %28 = vector.shape_cast %15 : vector<2x8xf32> to vector<2x1x8xf32>
    %29 = vector.broadcast %27 : vector<1x24x8xf32> to vector<2x24x8xf32>
    %30 = vector.broadcast %28 : vector<2x1x8xf32> to vector<2x24x8xf32>
    %31 = arith.mulf %29, %30 : vector<2x24x8xf32>
    %cst_16 = arith.constant dense<0.000000e+00> : vector<2x24xf32>
    %32 = vector.multi_reduction <add>, %31, %cst_16 [2] : vector<2x24x8xf32> to vector<2x24xf32>
    %33 = arith.negf %32 : vector<2x24xf32>
    %34 = math.exp %33 : vector<2x24xf32>
    %cst_17 = arith.constant 1.000000e+00 : f32
    %35 = vector.broadcast %cst_17 : f32 to vector<2x24xf32>
    %36 = arith.addf %35, %34 : vector<2x24xf32>
    %37 = arith.divf %35, %36 : vector<2x24xf32>
    %c0_18 = arith.constant 0 : index
    %c0_19 = arith.constant 0 : index
    %38 = vector.load %arg3[%c0_18, %c0_19] : memref<48x16xf32, #tpu.memory_space<vmem>>, vector<48x16xf32>
    %39 = vector.shape_cast %38 : vector<48x16xf32> to vector<1x48x16xf32>
    %40 = vector.shape_cast %25 : vector<2x16xf32> to vector<2x1x16xf32>
    %41 = vector.broadcast %39 : vector<1x48x16xf32> to vector<2x48x16xf32>
    %42 = vector.broadcast %40 : vector<2x1x16xf32> to vector<2x48x16xf32>
    %43 = arith.mulf %41, %42 : vector<2x48x16xf32>
    %cst_20 = arith.constant dense<0.000000e+00> : vector<2x48xf32>
    %44 = vector.multi_reduction <add>, %43, %cst_20 [2] : vector<2x48x16xf32> to vector<2x48xf32>
    %45 = arith.negf %44 : vector<2x48xf32>
    %46 = math.exp %45 : vector<2x48xf32>
    %cst_21 = arith.constant 1.000000e+00 : f32
    %47 = vector.broadcast %cst_21 : f32 to vector<2x48xf32>
    %48 = arith.addf %47, %46 : vector<2x48xf32>
    %49 = arith.divf %47, %48 : vector<2x48xf32>
    %c0_22 = arith.constant 0 : index
    %c0_23 = arith.constant 0 : index
    %50 = vector.load %arg4[%c0_22, %c0_23] : memref<48x16xf32, #tpu.memory_space<vmem>>, vector<48x16xf32>
    %51 = vector.shape_cast %50 : vector<48x16xf32> to vector<1x48x16xf32>
    %52 = vector.shape_cast %22 : vector<2x16xf32> to vector<2x1x16xf32>
    %53 = vector.broadcast %51 : vector<1x48x16xf32> to vector<2x48x16xf32>
    %54 = vector.broadcast %52 : vector<2x1x16xf32> to vector<2x48x16xf32>
    %55 = arith.mulf %53, %54 : vector<2x48x16xf32>
    %cst_24 = arith.constant dense<0.000000e+00> : vector<2x48xf32>
    %56 = vector.multi_reduction <add>, %55, %cst_24 [2] : vector<2x48x16xf32> to vector<2x48xf32>
    %57 = arith.negf %56 : vector<2x48xf32>
    %58 = math.exp %57 : vector<2x48xf32>
    %cst_25 = arith.constant 1.000000e+00 : f32
    %59 = vector.broadcast %cst_25 : f32 to vector<2x48xf32>
    %60 = arith.addf %59, %58 : vector<2x48xf32>
    %61 = arith.divf %59, %60 : vector<2x48xf32>
    %62 = vector.shape_cast %37 : vector<2x24xf32> to vector<2x8x3xf32>
    %63 = vector.shape_cast %12 : vector<1x3xf32> to vector<1x1x3xf32>
    %64 = vector.broadcast %63 : vector<1x1x3xf32> to vector<2x8x3xf32>
    %65 = arith.mulf %62, %64 : vector<2x8x3xf32>
    %66 = vector.shape_cast %49 : vector<2x48xf32> to vector<2x3x16xf32>
    %67 = vector.shape_cast %61 : vector<2x48xf32> to vector<2x3x16xf32>
    %68 = vector.shape_cast %66 : vector<2x3x16xf32> to vector<2x3x16x1xf32>
    %69 = vector.shape_cast %67 : vector<2x3x16xf32> to vector<2x3x1x16xf32>
    %70 = vector.broadcast %68 : vector<2x3x16x1xf32> to vector<2x3x16x16xf32>
    %71 = vector.broadcast %69 : vector<2x3x1x16xf32> to vector<2x3x16x16xf32>
    %72 = arith.mulf %70, %71 : vector<2x3x16x16xf32>
    %73 = vector.shape_cast %72 : vector<2x3x16x16xf32> to vector<2x3x256xf32>
    %74 = vector.extract_strided_slice %65 {offsets = [0, 0, 0], sizes = [2, 8, 1], strides = [1, 1, 1]} : vector<2x8x3xf32> to vector<2x8x1xf32>
    %75 = vector.extract_strided_slice %73 {offsets = [0, 0, 0], sizes = [2, 1, 256], strides = [1, 1, 1]} : vector<2x3x256xf32> to vector<2x1x256xf32>
    %76 = vector.broadcast %74 : vector<2x8x1xf32> to vector<2x8x256xf32>
    %77 = vector.broadcast %75 : vector<2x1x256xf32> to vector<2x8x256xf32>
    %78 = arith.mulf %76, %77 : vector<2x8x256xf32>
    %79 = vector.extract_strided_slice %65 {offsets = [0, 0, 1], sizes = [2, 8, 1], strides = [1, 1, 1]} : vector<2x8x3xf32> to vector<2x8x1xf32>
    %80 = vector.extract_strided_slice %73 {offsets = [0, 1, 0], sizes = [2, 1, 256], strides = [1, 1, 1]} : vector<2x3x256xf32> to vector<2x1x256xf32>
    %81 = vector.broadcast %79 : vector<2x8x1xf32> to vector<2x8x256xf32>
    %82 = vector.broadcast %80 : vector<2x1x256xf32> to vector<2x8x256xf32>
    %83 = arith.mulf %81, %82 : vector<2x8x256xf32>
    %84 = arith.addf %78, %83 : vector<2x8x256xf32>
    %85 = vector.extract_strided_slice %65 {offsets = [0, 0, 2], sizes = [2, 8, 1], strides = [1, 1, 1]} : vector<2x8x3xf32> to vector<2x8x1xf32>
    %86 = vector.extract_strided_slice %73 {offsets = [0, 2, 0], sizes = [2, 1, 256], strides = [1, 1, 1]} : vector<2x3x256xf32> to vector<2x1x256xf32>
    %87 = vector.broadcast %85 : vector<2x8x1xf32> to vector<2x8x256xf32>
    %88 = vector.broadcast %86 : vector<2x1x256xf32> to vector<2x8x256xf32>
    %89 = arith.mulf %87, %88 : vector<2x8x256xf32>
    %90 = arith.addf %84, %89 : vector<2x8x256xf32>
    %91 = arith.mulf %0, %90 : vector<2x8x256xf32>
    %cst_26 = arith.constant 0.000000e+00 : f32
    %92 = vector.broadcast %cst_26 : f32 to vector<2x8x256xf32>
    %93 = arith.maximumf %91, %92 : vector<2x8x256xf32>
    %94 = arith.addf %0, %93 : vector<2x8x256xf32>
    %c0_27 = arith.constant 0 : index
    %c0_28 = arith.constant 0 : index
    %c0_29 = arith.constant 0 : index
    %95 = vector.load %arg6[%c0_27, %c0_28, %c0_29] : memref<2x8x256xf32, #tpu.memory_space<vmem>>, vector<2x8x256xf32>
    tpu.vector_store %arg6[%c0_27, %c0_28, %c0_29], %94 {strides = array<i32>} : memref<2x8x256xf32, #tpu.memory_space<vmem>>, vector<2x8x256xf32>,
    return
  }
  func.func @transform_0(%arg0: i32) -> (i32, i32, i32) {
    %c0_i32 = arith.constant 0 : i32
    %c0_i32_0 = arith.constant 0 : i32
    %c0_i32_1 = arith.constant 0 : i32
    return %arg0, %c0_i32, %c0_i32_0 : i32, i32, i32
  }
  func.func @transform_1(%arg0: i32) -> (i32, i32) {
    %c0_i32 = arith.constant 0 : i32
    %c0_i32_0 = arith.constant 0 : i32
    %c0_i32_1 = arith.constant 0 : i32
    return %c0_i32, %c0_i32_0 : i32, i32
  }
  func.func @transform_2(%arg0: i32) -> (i32, i32) {
    %c0_i32 = arith.constant 0 : i32
    %c0_i32_0 = arith.constant 0 : i32
    %c0_i32_1 = arith.constant 0 : i32
    return %c0_i32, %c0_i32_0 : i32, i32
  }
  func.func @transform_3(%arg0: i32) -> (i32, i32) {
    %c0_i32 = arith.constant 0 : i32
    %c0_i32_0 = arith.constant 0 : i32
    %c0_i32_1 = arith.constant 0 : i32
    return %c0_i32, %c0_i32_0 : i32, i32
  }
  func.func @transform_4(%arg0: i32) -> (i32, i32) {
    %c0_i32 = arith.constant 0 : i32
    %c0_i32_0 = arith.constant 0 : i32
    %c0_i32_1 = arith.constant 0 : i32
    return %c0_i32, %c0_i32_0 : i32, i32
  }
  func.func @transform_5(%arg0: i32) -> (i32, i32, i32) {
    %c0_i32 = arith.constant 0 : i32
    %c0_i32_0 = arith.constant 0 : i32
    %c0_i32_1 = arith.constant 0 : i32
    return %arg0, %c0_i32, %c0_i32_0 : i32, i32, i32
  }
}

</mosaic_0001>

<llo_original>
// kernel: tpu_custom_call.1
$region0: #{tpu_custom_call.1}
  #allocation0 [shape = 'u32[]', space=smem, size = 0x4, offset = 0x4, fixed_abs, tag = 'smem constant byte address 0x4 - core index']
  #allocation1 [shape = 'u32[72,128]{1,0:T(1,128)}', space=vmem, size = 0x9000, scoped, tag = 'internal scratch']
  %s0 = inlined_call_operand.vmem [shape: f32[2,8,256], index: 0, kind: input, shape index: {}]
  %s1 = inlined_call_operand.vmem [shape: f32[24,8], index: 1, kind: input, shape index: {}]
  %s2 = inlined_call_operand.vmem [shape: f32[48,16], index: 2, kind: input, shape index: {}]
  %s3 = inlined_call_operand.vmem [shape: f32[48,16], index: 3, kind: input, shape index: {}]
  %s4 = inlined_call_operand.vmem [shape: f32[1,3], index: 4, kind: input, shape index: {}]
  %s5 = inlined_call_operand.hbm [shape: f32[2,8,256], index: 5, kind: output, shape index: {}]
  %s6 = sld [smem:[#allocation0]]
  $region30: #{tpu_custom_call.1} parent=0
    _
  %s8 = ssub.s32 1, %s6
  %s9 = scalar_select 0, %s8, %s6
  $region1: #{tpu_custom_call.1} parent=0
    #allocation2 [shape = 'u8[16384]{0}', space=vmem, size = 0x4000, scoped, tag = 'output window, operand 0, single buffered']
    #allocation3 [shape = 's32[1]{0}', space=sflag, size = 0x4, scoped, tag = 'scoped memory for tpu_custom_call.1']
    %10 = vsyncpa [#allocation3], 0
    // Predicated region
    $region2: #{tpu_custom_call.1} parent=1 // pred_check
      _
    $region3: #{tpu_custom_call.1} parent=1 // pred_check_branch
      %12 = sbr.rel (0) target = $region5
    $region4: #{tpu_custom_call.1} parent=1 // pred_region
      _
    $region5: #{tpu_custom_call.1} parent=1 // pred_fallthru
      _
    // Predicated region
    $region6: #{tpu_custom_call.1} parent=1 // pred_check
      _
    $region7: #{tpu_custom_call.1} parent=1 // pred_check_branch
      %14 = sbr.rel (0) target = $region9
    $region8: #{tpu_custom_call.1} parent=1 // pred_region
      _
    $region9: #{tpu_custom_call.1} parent=1 // pred_fallthru
      _
    // Predicated region
    $region10: #{tpu_custom_call.1} parent=1 // pred_check
      _
    $region11: #{tpu_custom_call.1} parent=1 // pred_check_branch
      %16 = sbr.rel (0) target = $region13
    $region12: #{tpu_custom_call.1} parent=1 // pred_region
      _
    $region13: #{tpu_custom_call.1} parent=1 // pred_fallthru
      _
    // Predicated region
    $region14: #{tpu_custom_call.1} parent=1 // pred_check
      _
    $region15: #{tpu_custom_call.1} parent=1 // pred_check_branch
      %18 = sbr.rel (0) target = $region17
    $region16: #{tpu_custom_call.1} parent=1 // pred_region
      _
    $region17: #{tpu_custom_call.1} parent=1 // pred_fallthru
      _
    // Predicated region
    $region18: #{tpu_custom_call.1} parent=1 // pred_check
      _
    $region19: #{tpu_custom_call.1} parent=1 // pred_check_branch
      %20 = sbr.rel (0) target = $region21
    $region20: #{tpu_custom_call.1} parent=1 // pred_region
      _
    $region21: #{tpu_custom_call.1} parent=1 // pred_fallthru
      _
    %v21 = vld [vmem:[%s0] sm:$0xff]
    %v22 = vld [vmem:[%s0 + $0x8] sm:$0xff]
    %v23 = vld [vmem:[%s0 + $0x10] sm:$0xff]
    %v24 = vld [vmem:[%s0 + $0x18] sm:$0xff]
    %v25 = vld [vmem:[%s4] sm:$0x1]
    %vm26 = vcmask 16384
    %v27 = vsel %vm26, %v25, -inf
    %28 = vmax.xlane.f32.xlu0 %v27
    %v29 = vpop.xlane.xlu0 %28
    %v30 = vsub.f32 %v25, %v29
    %v31 = vmul.f32 %v30, 1.442695
    %v32 = vpow.pop %v31
    %v33 = vsel %vm26, %v32, 0.0
    %34 = vadd.xlane.f32.xlu0 %v33
    %v35 = vpop.xlane.xlu0 %34
    %v36 = vrcp.pop %v35
    %v37 = vmul.f32 %v35, %v36
    %v38 = vsub.f32 1.0, %v37
    %v39 = vmul.f32 %v36, %v38
    %v40 = vadd.f32 %v36, %v39
    %vm41 = vweird.f32 %v35
    %vm42 = vweird.f32 %v36
    %vm43 = vmor %vm41, %vm42
    %v44 = vsel %vm43, %v36, %v40
    %v45 = vand.u32 2147483647, %v35
    %vm46 = vcmp.eq.f32.partialorder %v45, 8.507059e+37
    %v47 = vand.u32 %v35, 2147483648
    %v48 = vor.u32 1.1754944e-38, %v47
    %v49 = vsel %vm46, %v48, %v44
    %v50 = vmul.f32 %v32, %v49
    %v51 = vadd.f32 %v21, %v22
    %52 = vadd.xlane.f32.xlu0 %v51
    %v53 = vpop.xlane.xlu0 %52
    %v54 = vadd.f32 %v23, %v24
    %55 = vadd.xlane.f32.xlu0 %v54
    %v56 = vpop.xlane.xlu0 %55
    %v57 = vrcp.pop 256.0
    %v58 = vmul.f32 256.0, %v57
    %v59 = vsub.f32 1.0, %v58
    %v60 = vmul.f32 %v57, %v59
    %v61 = vadd.f32 %v57, %v60
    %vm62 = vweird.f32 %v57
    %v63 = vsel %vm62, %v57, %v61
    %v64 = vmul.f32 %v53, %v63
    %v65 = vmul.f32 %v56, %v63
    %v66 = vrot.slane %v21, 4
    %v67 = vadd.f32 %v21, %v66
    %v68 = vrot.slane %v67, 2
    %v69 = vadd.f32 %v67, %v68
    %v70 = vrot.slane %v69, 1
    %v71 = vadd.f32 %v69, %v70
    %v72 = vrot.slane %v22, 4
    %v73 = vadd.f32 %v22, %v72
    %v74 = vrot.slane %v73, 2
    %v75 = vadd.f32 %v73, %v74
    %v76 = vrot.slane %v75, 1
    %v77 = vadd.f32 %v75, %v76
    %v78 = vrot.slane %v23, 4
    %v79 = vadd.f32 %v23, %v78
    %v80 = vrot.slane %v79, 2
    %v81 = vadd.f32 %v79, %v80
    %v82 = vrot.slane %v81, 1
    %v83 = vadd.f32 %v81, %v82
    %v84 = vrot.slane %v24, 4
    %v85 = vadd.f32 %v24, %v84
    %v86 = vrot.slane %v85, 2
    %v87 = vadd.f32 %v85, %v86
    %v88 = vrot.slane %v87, 1
    %v89 = vadd.f32 %v87, %v88
    %v90 = vrcp.pop 8.0
    %v91 = vmul.f32 8.0, %v90
    %v92 = vsub.f32 1.0, %v91
    %v93 = vmul.f32 %v90, %v92
    %v94 = vadd.f32 %v90, %v93
    %vm95 = vweird.f32 %v90
    %v96 = vsel %vm95, %v90, %v94
    %v97 = vmul.f32 %v71, %v96
    %v98 = vmul.f32 %v77, %v96
    %v99 = vmul.f32 %v83, %v96
    %v100 = vmul.f32 %v89, %v96
    %103 = vrot.lane.b32.xlu0 %v97, 112
    %v104 = vpop.permute.xlu0 %103
    %105 = vrot.lane.b32.xlu0 %v99, 112
    %v106 = vpop.permute.xlu0 %105
    %107 = vrot.lane.b32.xlu0 %v97, 96
    %v108 = vpop.permute.xlu0 %107
    %109 = vrot.lane.b32.xlu0 %v99, 96
    %v110 = vpop.permute.xlu0 %109
    %111 = vrot.lane.b32.xlu0 %v97, 80
    %v112 = vpop.permute.xlu0 %111
    %113 = vrot.lane.b32.xlu0 %v99, 80
    %v114 = vpop.permute.xlu0 %113
    %115 = vrot.lane.b32.xlu0 %v97, 64
    %v116 = vpop.permute.xlu0 %115
    %117 = vrot.lane.b32.xlu0 %v99, 64
    %v118 = vpop.permute.xlu0 %117
    %119 = vrot.lane.b32.xlu0 %v97, 48
    %v120 = vpop.permute.xlu0 %119
    %121 = vrot.lane.b32.xlu0 %v99, 48
    %v122 = vpop.permute.xlu0 %121
    %123 = vrot.lane.b32.xlu0 %v97, 32
    %v124 = vpop.permute.xlu0 %123
    %125 = vrot.lane.b32.xlu0 %v99, 32
    %v126 = vpop.permute.xlu0 %125
    %127 = vrot.lane.b32.xlu0 %v97, 16
    %v128 = vpop.permute.xlu0 %127
    %129 = vrot.lane.b32.xlu0 %v99, 16
    %v130 = vpop.permute.xlu0 %129
    %133 = vrot.lane.b32.xlu0 %v98, 112
    %v134 = vpop.permute.xlu0 %133
    %135 = vrot.lane.b32.xlu0 %v100, 112
    %v136 = vpop.permute.xlu0 %135
    %137 = vrot.lane.b32.xlu0 %v98, 96
    %v138 = vpop.permute.xlu0 %137
    %139 = vrot.lane.b32.xlu0 %v100, 96
    %v140 = vpop.permute.xlu0 %139
    %141 = vrot.lane.b32.xlu0 %v98, 80
    %v142 = vpop.permute.xlu0 %141
    %143 = vrot.lane.b32.xlu0 %v100, 80
    %v144 = vpop.permute.xlu0 %143
    %145 = vrot.lane.b32.xlu0 %v98, 64
    %v146 = vpop.permute.xlu0 %145
    %147 = vrot.lane.b32.xlu0 %v100, 64
    %v148 = vpop.permute.xlu0 %147
    %149 = vrot.lane.b32.xlu0 %v98, 48
    %v150 = vpop.permute.xlu0 %149
    %151 = vrot.lane.b32.xlu0 %v100, 48
    %v152 = vpop.permute.xlu0 %151
    %153 = vrot.lane.b32.xlu0 %v98, 32
    %v154 = vpop.permute.xlu0 %153
    %155 = vrot.lane.b32.xlu0 %v100, 32
    %v156 = vpop.permute.xlu0 %155
    %157 = vrot.lane.b32.xlu0 %v98, 16
    %v158 = vpop.permute.xlu0 %157
    %159 = vrot.lane.b32.xlu0 %v100, 16
    %v160 = vpop.permute.xlu0 %159
    %v161 = vrot.slane %v99, 7
    %vm162 = vcmask 1041409
    %v163 = vsel %vm162, %v161, %v97
    %v164 = vrot.slane %v106, 7
    %v165 = vsel %vm162, %v164, %v104
    %v166 = vrot.slane %v110, 7
    %v167 = vsel %vm162, %v166, %v108
    %v168 = vrot.slane %v114, 7
    %v169 = vsel %vm162, %v168, %v112
    %v170 = vrot.slane %v118, 7
    %v171 = vsel %vm162, %v170, %v116
    %v172 = vrot.slane %v122, 7
    %v173 = vsel %vm162, %v172, %v120
    %v174 = vrot.slane %v126, 7
    %v175 = vsel %vm162, %v174, %v124
    %v176 = vrot.slane %v130, 7
    %v177 = vsel %vm162, %v176, %v128
    %v178 = vrot.slane %v100, 7
    %v179 = vsel %vm162, %v178, %v98
    %v180 = vrot.slane %v136, 7
    %v181 = vsel %vm162, %v180, %v134
    %v182 = vrot.slane %v140, 7
    %v183 = vsel %vm162, %v182, %v138
    %v184 = vrot.slane %v144, 7
    %v185 = vsel %vm162, %v184, %v142
    %v186 = vrot.slane %v148, 7
    %v187 = vsel %vm162, %v186, %v146
    %v188 = vrot.slane %v152, 7
    %v189 = vsel %vm162, %v188, %v150
    %v190 = vrot.slane %v156, 7
    %v191 = vsel %vm162, %v190, %v154
    %v192 = vrot.slane %v160, 7
    %v193 = vsel %vm162, %v192, %v158
    %v210 = vrot.slane %v167, 4
    %vm211 = vcmask 1047556
    %v212 = vsel %vm211, %v210, %v163
    %v214 = vunpack.c.l.s4 1983009808
    %v215 = vunpack.c.0.s8 %v214
    %v216 = vperm.slane %v212, %v215
    %v217 = vrot.slane %v169, 4
    %v218 = vsel %vm211, %v217, %v165
    %v220 = vunpack.c.l.s4 1983009808
    %v221 = vunpack.c.0.s8 %v220
    %v222 = vperm.slane %v218, %v221
    %v223 = vrot.slane %v175, 4
    %v224 = vsel %vm211, %v223, %v171
    %v226 = vunpack.c.l.s4 1983009808
    %v227 = vunpack.c.0.s8 %v226
    %v228 = vperm.slane %v224, %v227
    %v229 = vrot.slane %v177, 4
    %v230 = vsel %vm211, %v229, %v173
    %v232 = vunpack.c.l.s4 1983009808
    %v233 = vunpack.c.0.s8 %v232
    %v234 = vperm.slane %v230, %v233
    %v235 = vrot.slane %v222, 4
    %v236 = vsel %vm211, %v235, %v216
    %v238 = vunpack.c.l.s4 1934713408
    %v239 = vunpack.c.0.s8 %v238
    %v240 = vperm.slane %v236, %v239
    %v241 = vrot.slane %v234, 4
    %v242 = vsel %vm211, %v241, %v228
    %v244 = vunpack.c.l.s4 1934713408
    %v245 = vunpack.c.0.s8 %v244
    %v246 = vperm.slane %v242, %v245
    %v247 = vrot.slane %v246, 4
    %v248 = vsel %vm211, %v247, %v240
    %v249 = vrot.slane %v240, 4
    %v250 = vsel %vm211, %v246, %v249
    %v251 = vrot.slane %v183, 4
    %v252 = vsel %vm211, %v251, %v179
    %v254 = vunpack.c.l.s4 1983009808
    %v255 = vunpack.c.0.s8 %v254
    %v256 = vperm.slane %v252, %v255
    %v257 = vrot.slane %v185, 4
    %v258 = vsel %vm211, %v257, %v181
    %v260 = vunpack.c.l.s4 1983009808
    %v261 = vunpack.c.0.s8 %v260
    %v262 = vperm.slane %v258, %v261
    %v263 = vrot.slane %v191, 4
    %v264 = vsel %vm211, %v263, %v187
    %v266 = vunpack.c.l.s4 1983009808
    %v267 = vunpack.c.0.s8 %v266
    %v268 = vperm.slane %v264, %v267
    %v269 = vrot.slane %v193, 4
    %v270 = vsel %vm211, %v269, %v189
    %v272 = vunpack.c.l.s4 1983009808
    %v273 = vunpack.c.0.s8 %v272
    %v274 = vperm.slane %v270, %v273
    %v275 = vrot.slane %v262, 4
    %v276 = vsel %vm211, %v275, %v256
    %v278 = vunpack.c.l.s4 1934713408
    %v279 = vunpack.c.0.s8 %v278
    %v280 = vperm.slane %v276, %v279
    %v281 = vrot.slane %v274, 4
    %v282 = vsel %vm211, %v281, %v268
    %v284 = vunpack.c.l.s4 1934713408
    %v285 = vunpack.c.0.s8 %v284
    %v286 = vperm.slane %v282, %v285
    %v287 = vrot.slane %v286, 4
    %v288 = vsel %vm211, %v287, %v280
    %v289 = vrot.slane %v280, 4
    %v290 = vsel %vm211, %v286, %v289
    %vm291 = vcmask 130048
    %v292 = vsel %vm291, %v248, 0.0
    %293 = vadd.xlane.f32.xlu0 %v292
    %v294 = vpop.xlane.xlu0 %293
    %v295 = vsel %vm291, %v288, 0.0
    %296 = vadd.xlane.f32.xlu0 %v295
    %v297 = vpop.xlane.xlu0 %296
    %v298 = vsel %vm291, %v250, 0.0
    %299 = vadd.xlane.f32.xlu0 %v298
    %v300 = vpop.xlane.xlu0 %299
    %v301 = vsel %vm291, %v290, 0.0
    %302 = vadd.xlane.f32.xlu0 %v301
    %v303 = vpop.xlane.xlu0 %302
    %v304 = vrcp.pop 16.0
    %v305 = vmul.f32 16.0, %v304
    %v306 = vsub.f32 1.0, %v305
    %v307 = vmul.f32 %v304, %v306
    %v308 = vadd.f32 %v304, %v307
    %vm309 = vweird.f32 %v304
    %v310 = vsel %vm309, %v304, %v308
    %v311 = vmul.f32 %v294, %v310
    %v312 = vmul.f32 %v297, %v310
    %v313 = vmul.f32 %v300, %v310
    %v314 = vmul.f32 %v303, %v310
    %v315 = vadd.f32 %v292, %v295
    %v316 = vrot.slane %v315, 4
    %v317 = vadd.f32 %v315, %v316
    %v318 = vrot.slane %v317, 2
    %v319 = vadd.f32 %v317, %v318
    %v320 = vrot.slane %v319, 1
    %v321 = vadd.f32 %v319, %v320
    %v322 = vadd.f32 %v298, %v301
    %v323 = vrot.slane %v322, 4
    %v324 = vadd.f32 %v322, %v323
    %v325 = vrot.slane %v324, 2
    %v326 = vadd.f32 %v324, %v325
    %v327 = vrot.slane %v326, 1
    %v328 = vadd.f32 %v326, %v327
    %v329 = vmul.f32 %v321, %v310
    %v330 = vmul.f32 %v328, %v310
    %v331 = vld [vmem:[%s1] sm:$0xff]
    %v332 = vld [vmem:[%s1 + $0x8] sm:$0xff]
    %v333 = vld [vmem:[%s1 + $0x10] sm:$0xff]
    %v336 = vlaneseq
    %v337 = vand.u32 %v336, 127
    %v338 = vperm.slane %v64, %v337
    %v339 = vperm.slane %v65, %v337
    %vm340 = vcmask 1042434
    %v341 = vsel %vm340, %v338, %v338
    %vm342 = vcmask 1043459
    %v343 = vsel %vm342, %v338, %v341
    %vm344 = vcmask 1044484
    %v345 = vsel %vm344, %v338, %v343
    %vm346 = vcmask 1045509
    %v347 = vsel %vm346, %v338, %v345
    %vm348 = vcmask 1046534
    %v349 = vsel %vm348, %v338, %v347
    %vm350 = vcmask 1047559
    %v351 = vsel %vm350, %v338, %v349
    %v352 = vsel %vm340, %v339, %v339
    %v353 = vsel %vm342, %v339, %v352
    %v354 = vsel %vm344, %v339, %v353
    %v355 = vsel %vm346, %v339, %v354
    %v356 = vsel %vm348, %v339, %v355
    %v357 = vsel %vm350, %v339, %v356
    %v360 = vmul.f32 %v331, %v351
    %v361 = vmul.f32 %v332, %v351
    %v362 = vmul.f32 %v333, %v351
    %v363 = vmul.f32 %v331, %v357
    %v364 = vmul.f32 %v332, %v357
    %v365 = vmul.f32 %v333, %v357
    %vm366 = vcmask 64512
    %v367 = vsel %vm366, %v360, 0.0
    %368 = vadd.xlane.f32.xlu0 %v367
    %v369 = vpop.xlane.xlu0 %368
    %v370 = vsel %vm366, %v361, 0.0
    %371 = vadd.xlane.f32.xlu0 %v370
    %v372 = vpop.xlane.xlu0 %371
    %v373 = vsel %vm366, %v362, 0.0
    %374 = vadd.xlane.f32.xlu0 %v373
    %v375 = vpop.xlane.xlu0 %374
    %v376 = vsel %vm366, %v363, 0.0
    %377 = vadd.xlane.f32.xlu0 %v376
    %v378 = vpop.xlane.xlu0 %377
    %v379 = vsel %vm366, %v364, 0.0
    %380 = vadd.xlane.f32.xlu0 %v379
    %v381 = vpop.xlane.xlu0 %380
    %v382 = vsel %vm366, %v365, 0.0
    %383 = vadd.xlane.f32.xlu0 %v382
    %v384 = vpop.xlane.xlu0 %383
    %v385 = vxor.u32 %v369, 2147483648
    %v386 = vxor.u32 %v372, 2147483648
    %v387 = vxor.u32 %v375, 2147483648
    %v388 = vxor.u32 %v378, 2147483648
    %v389 = vxor.u32 %v381, 2147483648
    %v390 = vxor.u32 %v384, 2147483648
    %v391 = vmul.f32 %v385, 1.442695
    %v392 = vpow.pop %v391
    %v393 = vmul.f32 %v386, 1.442695
    %v394 = vpow.pop %v393
    %v395 = vmul.f32 %v387, 1.442695
    %v396 = vpow.pop %v395
    %v397 = vmul.f32 %v388, 1.442695
    %v398 = vpow.pop %v397
    %v399 = vmul.f32 %v389, 1.442695
    %v400 = vpow.pop %v399
    %v401 = vmul.f32 %v390, 1.442695
    %v402 = vpow.pop %v401
    %v403 = vadd.f32 %v392, 1.0
    %v404 = vadd.f32 %v394, 1.0
    %v405 = vadd.f32 %v396, 1.0
    %v406 = vadd.f32 %v398, 1.0
    %v407 = vadd.f32 %v400, 1.0
    %v408 = vadd.f32 %v402, 1.0
    %v409 = vrcp.pop %v403
    %v410 = vmul.f32 %v403, %v409
    %v411 = vsub.f32 1.0, %v410
    %v412 = vmul.f32 %v409, %v411
    %v413 = vadd.f32 %v409, %v412
    %vm414 = vweird.f32 %v403
    %vm415 = vweird.f32 %v409
    %vm416 = vmor %vm414, %vm415
    %v417 = vsel %vm416, %v409, %v413
    %v418 = vand.u32 2147483647, %v403
    %vm419 = vcmp.eq.f32.partialorder %v418, 8.507059e+37
    %v420 = vand.u32 %v403, 2147483648
    %v421 = vor.u32 1.1754944e-38, %v420
    %v422 = vsel %vm419, %v421, %v417
    %v423 = vmul.f32 1.0, %v422
    %v424 = vrcp.pop %v404
    %v425 = vmul.f32 %v404, %v424
    %v426 = vsub.f32 1.0, %v425
    %v427 = vmul.f32 %v424, %v426
    %v428 = vadd.f32 %v424, %v427
    %vm429 = vweird.f32 %v404
    %vm430 = vweird.f32 %v424
    %vm431 = vmor %vm429, %vm430
    %v432 = vsel %vm431, %v424, %v428
    %v433 = vand.u32 2147483647, %v404
    %vm434 = vcmp.eq.f32.partialorder %v433, 8.507059e+37
    %v435 = vand.u32 %v404, 2147483648
    %v436 = vor.u32 1.1754944e-38, %v435
    %v437 = vsel %vm434, %v436, %v432
    %v438 = vmul.f32 1.0, %v437
    %v439 = vrcp.pop %v405
    %v440 = vmul.f32 %v405, %v439
    %v441 = vsub.f32 1.0, %v440
    %v442 = vmul.f32 %v439, %v441
    %v443 = vadd.f32 %v439, %v442
    %vm444 = vweird.f32 %v405
    %vm445 = vweird.f32 %v439
    %vm446 = vmor %vm444, %vm445
    %v447 = vsel %vm446, %v439, %v443
    %v448 = vand.u32 2147483647, %v405
    %vm449 = vcmp.eq.f32.partialorder %v448, 8.507059e+37
    %v450 = vand.u32 %v405, 2147483648
    %v451 = vor.u32 1.1754944e-38, %v450
    %v452 = vsel %vm449, %v451, %v447
    %v453 = vmul.f32 1.0, %v452
    %v454 = vrcp.pop %v406
    %v455 = vmul.f32 %v406, %v454
    %v456 = vsub.f32 1.0, %v455
    %v457 = vmul.f32 %v454, %v456
    %v458 = vadd.f32 %v454, %v457
    %vm459 = vweird.f32 %v406
    %vm460 = vweird.f32 %v454
    %vm461 = vmor %vm459, %vm460
    %v462 = vsel %vm461, %v454, %v458
    %v463 = vand.u32 2147483647, %v406
    %vm464 = vcmp.eq.f32.partialorder %v463, 8.507059e+37
    %v465 = vand.u32 %v406, 2147483648
    %v466 = vor.u32 1.1754944e-38, %v465
    %v467 = vsel %vm464, %v466, %v462
    %v468 = vmul.f32 1.0, %v467
    %v469 = vrcp.pop %v407
    %v470 = vmul.f32 %v407, %v469
    %v471 = vsub.f32 1.0, %v470
    %v472 = vmul.f32 %v469, %v471
    %v473 = vadd.f32 %v469, %v472
    %vm474 = vweird.f32 %v407
    %vm475 = vweird.f32 %v469
    %vm476 = vmor %vm474, %vm475
    %v477 = vsel %vm476, %v469, %v473
    %v478 = vand.u32 2147483647, %v407
    %vm479 = vcmp.eq.f32.partialorder %v478, 8.507059e+37
    %v480 = vand.u32 %v407, 2147483648
    %v481 = vor.u32 1.1754944e-38, %v480
    %v482 = vsel %vm479, %v481, %v477
    %v483 = vmul.f32 1.0, %v482
    %v484 = vrcp.pop %v408
    %v485 = vmul.f32 %v408, %v484
    %v486 = vsub.f32 1.0, %v485
    %v487 = vmul.f32 %v484, %v486
    %v488 = vadd.f32 %v484, %v487
    %vm489 = vweird.f32 %v408
    %vm490 = vweird.f32 %v484
    %vm491 = vmor %vm489, %vm490
    %v492 = vsel %vm491, %v484, %v488
    %v493 = vand.u32 2147483647, %v408
    %vm494 = vcmp.eq.f32.partialorder %v493, 8.507059e+37
    %v495 = vand.u32 %v408, 2147483648
    %v496 = vor.u32 1.1754944e-38, %v495
    %v497 = vsel %vm494, %v496, %v492
    %v498 = vmul.f32 1.0, %v497
    %v499 = vld [vmem:[%s2] sm:$0xff]
    %v500 = vld [vmem:[%s2 + $0x8] sm:$0xff]
    %v501 = vld [vmem:[%s2 + $0x10] sm:$0xff]
    %v502 = vld [vmem:[%s2 + $0x18] sm:$0xff]
    %v503 = vld [vmem:[%s2 + $0x20] sm:$0xff]
    %v504 = vld [vmem:[%s2 + $0x28] sm:$0xff]
    %v505 = vmul.f32 %v499, %v329
    %v506 = vmul.f32 %v500, %v329
    %v507 = vmul.f32 %v501, %v329
    %v508 = vmul.f32 %v502, %v329
    %v509 = vmul.f32 %v503, %v329
    %v510 = vmul.f32 %v504, %v329
    %v511 = vmul.f32 %v499, %v330
    %v512 = vmul.f32 %v500, %v330
    %v513 = vmul.f32 %v501, %v330
    %v514 = vmul.f32 %v502, %v330
    %v515 = vmul.f32 %v503, %v330
    %v516 = vmul.f32 %v504, %v330
    %v517 = vsel %vm291, %v505, 0.0
    %518 = vadd.xlane.f32.xlu0 %v517
    %v519 = vpop.xlane.xlu0 %518
    %v520 = vsel %vm291, %v506, 0.0
    %521 = vadd.xlane.f32.xlu0 %v520
    %v522 = vpop.xlane.xlu0 %521
    %v523 = vsel %vm291, %v507, 0.0
    %524 = vadd.xlane.f32.xlu0 %v523
    %v525 = vpop.xlane.xlu0 %524
    %v526 = vsel %vm291, %v508, 0.0
    %527 = vadd.xlane.f32.xlu0 %v526
    %v528 = vpop.xlane.xlu0 %527
    %v529 = vsel %vm291, %v509, 0.0
    %530 = vadd.xlane.f32.xlu0 %v529
    %v531 = vpop.xlane.xlu0 %530
    %v532 = vsel %vm291, %v510, 0.0
    %533 = vadd.xlane.f32.xlu0 %v532
    %v534 = vpop.xlane.xlu0 %533
    %v535 = vsel %vm291, %v511, 0.0
    %536 = vadd.xlane.f32.xlu0 %v535
    %v537 = vpop.xlane.xlu0 %536
    %v538 = vsel %vm291, %v512, 0.0
    %539 = vadd.xlane.f32.xlu0 %v538
    %v540 = vpop.xlane.xlu0 %539
    %v541 = vsel %vm291, %v513, 0.0
    %542 = vadd.xlane.f32.xlu0 %v541
    %v543 = vpop.xlane.xlu0 %542
    %v544 = vsel %vm291, %v514, 0.0
    %545 = vadd.xlane.f32.xlu0 %v544
    %v546 = vpop.xlane.xlu0 %545
    %v547 = vsel %vm291, %v515, 0.0
    %548 = vadd.xlane.f32.xlu0 %v547
    %v549 = vpop.xlane.xlu0 %548
    %v550 = vsel %vm291, %v516, 0.0
    %551 = vadd.xlane.f32.xlu0 %v550
    %v552 = vpop.xlane.xlu0 %551
    %v553 = vxor.u32 %v519, 2147483648
    %v554 = vxor.u32 %v522, 2147483648
    %v555 = vxor.u32 %v525, 2147483648
    %v556 = vxor.u32 %v528, 2147483648
    %v557 = vxor.u32 %v531, 2147483648
    %v558 = vxor.u32 %v534, 2147483648
    %v559 = vxor.u32 %v537, 2147483648
    %v560 = vxor.u32 %v540, 2147483648
    %v561 = vxor.u32 %v543, 2147483648
    %v562 = vxor.u32 %v546, 2147483648
    %v563 = vxor.u32 %v549, 2147483648
    %v564 = vxor.u32 %v552, 2147483648
    %v565 = vmul.f32 %v553, 1.442695
    %v566 = vpow.pop %v565
    %v567 = vmul.f32 %v554, 1.442695
    %v568 = vpow.pop %v567
    %v569 = vmul.f32 %v555, 1.442695
    %v570 = vpow.pop %v569
    %v571 = vmul.f32 %v556, 1.442695
    %v572 = vpow.pop %v571
    %v573 = vmul.f32 %v557, 1.442695
    %v574 = vpow.pop %v573
    %v575 = vmul.f32 %v558, 1.442695
    %v576 = vpow.pop %v575
    %v577 = vmul.f32 %v559, 1.442695
    %v578 = vpow.pop %v577
    %v579 = vmul.f32 %v560, 1.442695
    %v580 = vpow.pop %v579
    %v581 = vmul.f32 %v561, 1.442695
    %v582 = vpow.pop %v581
    %v583 = vmul.f32 %v562, 1.442695
    %v584 = vpow.pop %v583
    %v585 = vmul.f32 %v563, 1.442695
    %v586 = vpow.pop %v585
    %v587 = vmul.f32 %v564, 1.442695
    %v588 = vpow.pop %v587
    %v589 = vadd.f32 %v566, 1.0
    %v590 = vadd.f32 %v568, 1.0
    %v591 = vadd.f32 %v570, 1.0
    %v592 = vadd.f32 %v572, 1.0
    %v593 = vadd.f32 %v574, 1.0
    %v594 = vadd.f32 %v576, 1.0
    %v595 = vadd.f32 %v578, 1.0
    %v596 = vadd.f32 %v580, 1.0
    %v597 = vadd.f32 %v582, 1.0
    %v598 = vadd.f32 %v584, 1.0
    %v599 = vadd.f32 %v586, 1.0
    %v600 = vadd.f32 %v588, 1.0
    %v601 = vrcp.pop %v589
    %v602 = vmul.f32 %v589, %v601
    %v603 = vsub.f32 1.0, %v602
    %v604 = vmul.f32 %v601, %v603
    %v605 = vadd.f32 %v601, %v604
    %vm606 = vweird.f32 %v589
    %vm607 = vweird.f32 %v601
    %vm608 = vmor %vm606, %vm607
    %v609 = vsel %vm608, %v601, %v605
    %v610 = vand.u32 2147483647, %v589
    %vm611 = vcmp.eq.f32.partialorder %v610, 8.507059e+37
    %v612 = vand.u32 %v589, 2147483648
    %v613 = vor.u32 1.1754944e-38, %v612
    %v614 = vsel %vm611, %v613, %v609
    %v615 = vmul.f32 1.0, %v614
    %v616 = vrcp.pop %v590
    %v617 = vmul.f32 %v590, %v616
    %v618 = vsub.f32 1.0, %v617
    %v619 = vmul.f32 %v616, %v618
    %v620 = vadd.f32 %v616, %v619
    %vm621 = vweird.f32 %v590
    %vm622 = vweird.f32 %v616
    %vm623 = vmor %vm621, %vm622
    %v624 = vsel %vm623, %v616, %v620
    %v625 = vand.u32 2147483647, %v590
    %vm626 = vcmp.eq.f32.partialorder %v625, 8.507059e+37
    %v627 = vand.u32 %v590, 2147483648
    %v628 = vor.u32 1.1754944e-38, %v627
    %v629 = vsel %vm626, %v628, %v624
    %v630 = vmul.f32 1.0, %v629
    %v631 = vrcp.pop %v591
    %v632 = vmul.f32 %v591, %v631
    %v633 = vsub.f32 1.0, %v632
    %v634 = vmul.f32 %v631, %v633
    %v635 = vadd.f32 %v631, %v634
    %vm636 = vweird.f32 %v591
    %vm637 = vweird.f32 %v631
    %vm638 = vmor %vm636, %vm637
    %v639 = vsel %vm638, %v631, %v635
    %v640 = vand.u32 2147483647, %v591
    %vm641 = vcmp.eq.f32.partialorder %v640, 8.507059e+37
    %v642 = vand.u32 %v591, 2147483648
    %v643 = vor.u32 1.1754944e-38, %v642
    %v644 = vsel %vm641, %v643, %v639
    %v645 = vmul.f32 1.0, %v644
    %v646 = vrcp.pop %v592
    %v647 = vmul.f32 %v592, %v646
    %v648 = vsub.f32 1.0, %v647
    %v649 = vmul.f32 %v646, %v648
    %v650 = vadd.f32 %v646, %v649
    %vm651 = vweird.f32 %v592
    %vm652 = vweird.f32 %v646
    %vm653 = vmor %vm651, %vm652
    %v654 = vsel %vm653, %v646, %v650
    %v655 = vand.u32 2147483647, %v592
    %vm656 = vcmp.eq.f32.partialorder %v655, 8.507059e+37
    %v657 = vand.u32 %v592, 2147483648
    %v658 = vor.u32 1.1754944e-38, %v657
    %v659 = vsel %vm656, %v658, %v654
    %v660 = vmul.f32 1.0, %v659
    %v661 = vrcp.pop %v593
    %v662 = vmul.f32 %v593, %v661
    %v663 = vsub.f32 1.0, %v662
    %v664 = vmul.f32 %v661, %v663
    %v665 = vadd.f32 %v661, %v664
    %vm666 = vweird.f32 %v593
    %vm667 = vweird.f32 %v661
    %vm668 = vmor %vm666, %vm667
    %v669 = vsel %vm668, %v661, %v665
    %v670 = vand.u32 2147483647, %v593
    %vm671 = vcmp.eq.f32.partialorder %v670, 8.507059e+37
    %v672 = vand.u32 %v593, 2147483648
    %v673 = vor.u32 1.1754944e-38, %v672
    %v674 = vsel %vm671, %v673, %v669
    %v675 = vmul.f32 1.0, %v674
    %v676 = vrcp.pop %v594
    %v677 = vmul.f32 %v594, %v676
    %v678 = vsub.f32 1.0, %v677
    %v679 = vmul.f32 %v676, %v678
    %v680 = vadd.f32 %v676, %v679
    %vm681 = vweird.f32 %v594
    %vm682 = vweird.f32 %v676
    %vm683 = vmor %vm681, %vm682
    %v684 = vsel %vm683, %v676, %v680
    %v685 = vand.u32 2147483647, %v594
    %vm686 = vcmp.eq.f32.partialorder %v685, 8.507059e+37
    %v687 = vand.u32 %v594, 2147483648
    %v688 = vor.u32 1.1754944e-38, %v687
    %v689 = vsel %vm686, %v688, %v684
    %v690 = vmul.f32 1.0, %v689
    %v691 = vrcp.pop %v595
    %v692 = vmul.f32 %v595, %v691
    %v693 = vsub.f32 1.0, %v692
    %v694 = vmul.f32 %v691, %v693
    %v695 = vadd.f32 %v691, %v694
    %vm696 = vweird.f32 %v595
    %vm697 = vweird.f32 %v691
    %vm698 = vmor %vm696, %vm697
    %v699 = vsel %vm698, %v691, %v695
    %v700 = vand.u32 2147483647, %v595
    %vm701 = vcmp.eq.f32.partialorder %v700, 8.507059e+37
    %v702 = vand.u32 %v595, 2147483648
    %v703 = vor.u32 1.1754944e-38, %v702
    %v704 = vsel %vm701, %v703, %v699
    %v705 = vmul.f32 1.0, %v704
    %v706 = vrcp.pop %v596
    %v707 = vmul.f32 %v596, %v706
    %v708 = vsub.f32 1.0, %v707
    %v709 = vmul.f32 %v706, %v708
    %v710 = vadd.f32 %v706, %v709
    %vm711 = vweird.f32 %v596
    %vm712 = vweird.f32 %v706
    %vm713 = vmor %vm711, %vm712
    %v714 = vsel %vm713, %v706, %v710
    %v715 = vand.u32 2147483647, %v596
    %vm716 = vcmp.eq.f32.partialorder %v715, 8.507059e+37
    %v717 = vand.u32 %v596, 2147483648
    %v718 = vor.u32 1.1754944e-38, %v717
    %v719 = vsel %vm716, %v718, %v714
    %v720 = vmul.f32 1.0, %v719
    %v721 = vrcp.pop %v597
    %v722 = vmul.f32 %v597, %v721
    %v723 = vsub.f32 1.0, %v722
    %v724 = vmul.f32 %v721, %v723
    %v725 = vadd.f32 %v721, %v724
    %vm726 = vweird.f32 %v597
    %vm727 = vweird.f32 %v721
    %vm728 = vmor %vm726, %vm727
    %v729 = vsel %vm728, %v721, %v725
    %v730 = vand.u32 2147483647, %v597
    %vm731 = vcmp.eq.f32.partialorder %v730, 8.507059e+37
    %v732 = vand.u32 %v597, 2147483648
    %v733 = vor.u32 1.1754944e-38, %v732
    %v734 = vsel %vm731, %v733, %v729
    %v735 = vmul.f32 1.0, %v734
    %v736 = vrcp.pop %v598
    %v737 = vmul.f32 %v598, %v736
    %v738 = vsub.f32 1.0, %v737
    %v739 = vmul.f32 %v736, %v738
    %v740 = vadd.f32 %v736, %v739
    %vm741 = vweird.f32 %v598
    %vm742 = vweird.f32 %v736
    %vm743 = vmor %vm741, %vm742
    %v744 = vsel %vm743, %v736, %v740
    %v745 = vand.u32 2147483647, %v598
    %vm746 = vcmp.eq.f32.partialorder %v745, 8.507059e+37
    %v747 = vand.u32 %v598, 2147483648
    %v748 = vor.u32 1.1754944e-38, %v747
    %v749 = vsel %vm746, %v748, %v744
    %v750 = vmul.f32 1.0, %v749
    %v751 = vrcp.pop %v599
    %v752 = vmul.f32 %v599, %v751
    %v753 = vsub.f32 1.0, %v752
    %v754 = vmul.f32 %v751, %v753
    %v755 = vadd.f32 %v751, %v754
    %vm756 = vweird.f32 %v599
    %vm757 = vweird.f32 %v751
    %vm758 = vmor %vm756, %vm757
    %v759 = vsel %vm758, %v751, %v755
    %v760 = vand.u32 2147483647, %v599
    %vm761 = vcmp.eq.f32.partialorder %v760, 8.507059e+37
    %v762 = vand.u32 %v599, 2147483648
    %v763 = vor.u32 1.1754944e-38, %v762
    %v764 = vsel %vm761, %v763, %v759
    %v765 = vmul.f32 1.0, %v764
    %v766 = vrcp.pop %v600
    %v767 = vmul.f32 %v600, %v766
    %v768 = vsub.f32 1.0, %v767
    %v769 = vmul.f32 %v766, %v768
    %v770 = vadd.f32 %v766, %v769
    %vm771 = vweird.f32 %v600
    %vm772 = vweird.f32 %v766
    %vm773 = vmor %vm771, %vm772
    %v774 = vsel %vm773, %v766, %v770
    %v775 = vand.u32 2147483647, %v600
    %vm776 = vcmp.eq.f32.partialorder %v775, 8.507059e+37
    %v777 = vand.u32 %v600, 2147483648
    %v778 = vor.u32 1.1754944e-38, %v777
    %v779 = vsel %vm776, %v778, %v774
    %v780 = vmul.f32 1.0, %v779
    %v781 = vld [vmem:[%s3] sm:$0xff]
    %v782 = vld [vmem:[%s3 + $0x8] sm:$0xff]
    %v783 = vld [vmem:[%s3 + $0x10] sm:$0xff]
    %v784 = vld [vmem:[%s3 + $0x18] sm:$0xff]
    %v785 = vld [vmem:[%s3 + $0x20] sm:$0xff]
    %v786 = vld [vmem:[%s3 + $0x28] sm:$0xff]
    %v791 = vperm.slane %v311, %v337
    %v792 = vadd.s32 %v337, 4294967288
    %v793 = vperm.slane %v312, %v792
    %vm794 = vcmask 130112
    %v795 = vsel %vm794, %v793, %v791
    %v796 = vperm.slane %v313, %v337
    %v797 = vperm.slane %v314, %v792
    %v798 = vsel %vm794, %v797, %v796
    %v799 = vsel %vm340, %v795, %v795
    %v800 = vsel %vm342, %v795, %v799
    %v801 = vsel %vm344, %v795, %v800
    %v802 = vsel %vm346, %v795, %v801
    %v803 = vsel %vm348, %v795, %v802
    %v804 = vsel %vm350, %v795, %v803
    %v805 = vsel %vm340, %v798, %v798
    %v806 = vsel %vm342, %v798, %v805
    %v807 = vsel %vm344, %v798, %v806
    %v808 = vsel %vm346, %v798, %v807
    %v809 = vsel %vm348, %v798, %v808
    %v810 = vsel %vm350, %v798, %v809
    %v813 = vmul.f32 %v781, %v804
    %v814 = vmul.f32 %v782, %v804
    %v815 = vmul.f32 %v783, %v804
    %v816 = vmul.f32 %v784, %v804
    %v817 = vmul.f32 %v785, %v804
    %v818 = vmul.f32 %v786, %v804
    %v819 = vmul.f32 %v781, %v810
    %v820 = vmul.f32 %v782, %v810
    %v821 = vmul.f32 %v783, %v810
    %v822 = vmul.f32 %v784, %v810
    %v823 = vmul.f32 %v785, %v810
    %v824 = vmul.f32 %v786, %v810
    %v825 = vsel %vm291, %v813, 0.0
    %826 = vadd.xlane.f32.xlu0 %v825
    %v827 = vpop.xlane.xlu0 %826
    %v828 = vsel %vm291, %v814, 0.0
    %829 = vadd.xlane.f32.xlu0 %v828
    %v830 = vpop.xlane.xlu0 %829
    %v831 = vsel %vm291, %v815, 0.0
    %832 = vadd.xlane.f32.xlu0 %v831
    %v833 = vpop.xlane.xlu0 %832
    %v834 = vsel %vm291, %v816, 0.0
    %835 = vadd.xlane.f32.xlu0 %v834
    %v836 = vpop.xlane.xlu0 %835
    %v837 = vsel %vm291, %v817, 0.0
    %838 = vadd.xlane.f32.xlu0 %v837
    %v839 = vpop.xlane.xlu0 %838
    %v840 = vsel %vm291, %v818, 0.0
    %841 = vadd.xlane.f32.xlu0 %v840
    %v842 = vpop.xlane.xlu0 %841
    %v843 = vsel %vm291, %v819, 0.0
    %844 = vadd.xlane.f32.xlu0 %v843
    %v845 = vpop.xlane.xlu0 %844
    %v846 = vsel %vm291, %v820, 0.0
    %847 = vadd.xlane.f32.xlu0 %v846
    %v848 = vpop.xlane.xlu0 %847
    %v849 = vsel %vm291, %v821, 0.0
    %850 = vadd.xlane.f32.xlu0 %v849
    %v851 = vpop.xlane.xlu0 %850
    %v852 = vsel %vm291, %v822, 0.0
    %853 = vadd.xlane.f32.xlu0 %v852
    %v854 = vpop.xlane.xlu0 %853
    %v855 = vsel %vm291, %v823, 0.0
    %856 = vadd.xlane.f32.xlu0 %v855
    %v857 = vpop.xlane.xlu0 %856
    %v858 = vsel %vm291, %v824, 0.0
    %859 = vadd.xlane.f32.xlu0 %v858
    %v860 = vpop.xlane.xlu0 %859
    %v861 = vxor.u32 %v827, 2147483648
    %v862 = vxor.u32 %v830, 2147483648
    %v863 = vxor.u32 %v833, 2147483648
    %v864 = vxor.u32 %v836, 2147483648
    %v865 = vxor.u32 %v839, 2147483648
    %v866 = vxor.u32 %v842, 2147483648
    %v867 = vxor.u32 %v845, 2147483648
    %v868 = vxor.u32 %v848, 2147483648
    %v869 = vxor.u32 %v851, 2147483648
    %v870 = vxor.u32 %v854, 2147483648
    %v871 = vxor.u32 %v857, 2147483648
    %v872 = vxor.u32 %v860, 2147483648
    %v873 = vmul.f32 %v861, 1.442695
    %v874 = vpow.pop %v873
    %v875 = vmul.f32 %v862, 1.442695
    %v876 = vpow.pop %v875
    %v877 = vmul.f32 %v863, 1.442695
    %v878 = vpow.pop %v877
    %v879 = vmul.f32 %v864, 1.442695
    %v880 = vpow.pop %v879
    %v881 = vmul.f32 %v865, 1.442695
    %v882 = vpow.pop %v881
    %v883 = vmul.f32 %v866, 1.442695
    %v884 = vpow.pop %v883
    %v885 = vmul.f32 %v867, 1.442695
    %v886 = vpow.pop %v885
    %v887 = vmul.f32 %v868, 1.442695
    %v888 = vpow.pop %v887
    %v889 = vmul.f32 %v869, 1.442695
    %v890 = vpow.pop %v889
    %v891 = vmul.f32 %v870, 1.442695
    %v892 = vpow.pop %v891
    %v893 = vmul.f32 %v871, 1.442695
    %v894 = vpow.pop %v893
    %v895 = vmul.f32 %v872, 1.442695
    %v896 = vpow.pop %v895
    %v897 = vadd.f32 %v874, 1.0
    %v898 = vadd.f32 %v876, 1.0
    %v899 = vadd.f32 %v878, 1.0
    %v900 = vadd.f32 %v880, 1.0
    %v901 = vadd.f32 %v882, 1.0
    %v902 = vadd.f32 %v884, 1.0
    %v903 = vadd.f32 %v886, 1.0
    %v904 = vadd.f32 %v888, 1.0
    %v905 = vadd.f32 %v890, 1.0
    %v906 = vadd.f32 %v892, 1.0
    %v907 = vadd.f32 %v894, 1.0
    %v908 = vadd.f32 %v896, 1.0
    %v909 = vrcp.pop %v897
    %v910 = vmul.f32 %v897, %v909
    %v911 = vsub.f32 1.0, %v910
    %v912 = vmul.f32 %v909, %v911
    %v913 = vadd.f32 %v909, %v912
    %vm914 = vweird.f32 %v897
    %vm915 = vweird.f32 %v909
    %vm916 = vmor %vm914, %vm915
    %v917 = vsel %vm916, %v909, %v913
    %v918 = vand.u32 2147483647, %v897
    %vm919 = vcmp.eq.f32.partialorder %v918, 8.507059e+37
    %v920 = vand.u32 %v897, 2147483648
    %v921 = vor.u32 1.1754944e-38, %v920
    %v922 = vsel %vm919, %v921, %v917
    %v923 = vmul.f32 1.0, %v922
    %v924 = vrcp.pop %v898
    %v925 = vmul.f32 %v898, %v924
    %v926 = vsub.f32 1.0, %v925
    %v927 = vmul.f32 %v924, %v926
    %v928 = vadd.f32 %v924, %v927
    %vm929 = vweird.f32 %v898
    %vm930 = vweird.f32 %v924
    %vm931 = vmor %vm929, %vm930
    %v932 = vsel %vm931, %v924, %v928
    %v933 = vand.u32 2147483647, %v898
    %vm934 = vcmp.eq.f32.partialorder %v933, 8.507059e+37
    %v935 = vand.u32 %v898, 2147483648
    %v936 = vor.u32 1.1754944e-38, %v935
    %v937 = vsel %vm934, %v936, %v932
    %v938 = vmul.f32 1.0, %v937
    %v939 = vrcp.pop %v899
    %v940 = vmul.f32 %v899, %v939
    %v941 = vsub.f32 1.0, %v940
    %v942 = vmul.f32 %v939, %v941
    %v943 = vadd.f32 %v939, %v942
    %vm944 = vweird.f32 %v899
    %vm945 = vweird.f32 %v939
    %vm946 = vmor %vm944, %vm945
    %v947 = vsel %vm946, %v939, %v943
    %v948 = vand.u32 2147483647, %v899
    %vm949 = vcmp.eq.f32.partialorder %v948, 8.507059e+37
    %v950 = vand.u32 %v899, 2147483648
    %v951 = vor.u32 1.1754944e-38, %v950
    %v952 = vsel %vm949, %v951, %v947
    %v953 = vmul.f32 1.0, %v952
    %v954 = vrcp.pop %v900
    %v955 = vmul.f32 %v900, %v954
    %v956 = vsub.f32 1.0, %v955
    %v957 = vmul.f32 %v954, %v956
    %v958 = vadd.f32 %v954, %v957
    %vm959 = vweird.f32 %v900
    %vm960 = vweird.f32 %v954
    %vm961 = vmor %vm959, %vm960
    %v962 = vsel %vm961, %v954, %v958
    %v963 = vand.u32 2147483647, %v900
    %vm964 = vcmp.eq.f32.partialorder %v963, 8.507059e+37
    %v965 = vand.u32 %v900, 2147483648
    %v966 = vor.u32 1.1754944e-38, %v965
    %v967 = vsel %vm964, %v966, %v962
    %v968 = vmul.f32 1.0, %v967
    %v969 = vrcp.pop %v901
    %v970 = vmul.f32 %v901, %v969
    %v971 = vsub.f32 1.0, %v970
    %v972 = vmul.f32 %v969, %v971
    %v973 = vadd.f32 %v969, %v972
    %vm974 = vweird.f32 %v901
    %vm975 = vweird.f32 %v969
    %vm976 = vmor %vm974, %vm975
    %v977 = vsel %vm976, %v969, %v973
    %v978 = vand.u32 2147483647, %v901
    %vm979 = vcmp.eq.f32.partialorder %v978, 8.507059e+37
    %v980 = vand.u32 %v901, 2147483648
    %v981 = vor.u32 1.1754944e-38, %v980
    %v982 = vsel %vm979, %v981, %v977
    %v983 = vmul.f32 1.0, %v982
    %v984 = vrcp.pop %v902
    %v985 = vmul.f32 %v902, %v984
    %v986 = vsub.f32 1.0, %v985
    %v987 = vmul.f32 %v984, %v986
    %v988 = vadd.f32 %v984, %v987
    %vm989 = vweird.f32 %v902
    %vm990 = vweird.f32 %v984
    %vm991 = vmor %vm989, %vm990
    %v992 = vsel %vm991, %v984, %v988
    %v993 = vand.u32 2147483647, %v902
    %vm994 = vcmp.eq.f32.partialorder %v993, 8.507059e+37
    %v995 = vand.u32 %v902, 2147483648
    %v996 = vor.u32 1.1754944e-38, %v995
    %v997 = vsel %vm994, %v996, %v992
    %v998 = vmul.f32 1.0, %v997
    %v999 = vrcp.pop %v903
    %v1000 = vmul.f32 %v903, %v999
    %v1001 = vsub.f32 1.0, %v1000
    %v1002 = vmul.f32 %v999, %v1001
    %v1003 = vadd.f32 %v999, %v1002
    %vm1004 = vweird.f32 %v903
    %vm1005 = vweird.f32 %v999
    %vm1006 = vmor %vm1004, %vm1005
    %v1007 = vsel %vm1006, %v999, %v1003
    %v1008 = vand.u32 2147483647, %v903
    %vm1009 = vcmp.eq.f32.partialorder %v1008, 8.507059e+37
    %v1010 = vand.u32 %v903, 2147483648
    %v1011 = vor.u32 1.1754944e-38, %v1010
    %v1012 = vsel %vm1009, %v1011, %v1007
    %v1013 = vmul.f32 1.0, %v1012
    %v1014 = vrcp.pop %v904
    %v1015 = vmul.f32 %v904, %v1014
    %v1016 = vsub.f32 1.0, %v1015
    %v1017 = vmul.f32 %v1014, %v1016
    %v1018 = vadd.f32 %v1014, %v1017
    %vm1019 = vweird.f32 %v904
    %vm1020 = vweird.f32 %v1014
    %vm1021 = vmor %vm1019, %vm1020
    %v1022 = vsel %vm1021, %v1014, %v1018
    %v1023 = vand.u32 2147483647, %v904
    %vm1024 = vcmp.eq.f32.partialorder %v1023, 8.507059e+37
    %v1025 = vand.u32 %v904, 2147483648
    %v1026 = vor.u32 1.1754944e-38, %v1025
    %v1027 = vsel %vm1024, %v1026, %v1022
    %v1028 = vmul.f32 1.0, %v1027
    %v1029 = vrcp.pop %v905
    %v1030 = vmul.f32 %v905, %v1029
    %v1031 = vsub.f32 1.0, %v1030
    %v1032 = vmul.f32 %v1029, %v1031
    %v1033 = vadd.f32 %v1029, %v1032
    %vm1034 = vweird.f32 %v905
    %vm1035 = vweird.f32 %v1029
    %vm1036 = vmor %vm1034, %vm1035
    %v1037 = vsel %vm1036, %v1029, %v1033
    %v1038 = vand.u32 2147483647, %v905
    %vm1039 = vcmp.eq.f32.partialorder %v1038, 8.507059e+37
    %v1040 = vand.u32 %v905, 2147483648
    %v1041 = vor.u32 1.1754944e-38, %v1040
    %v1042 = vsel %vm1039, %v1041, %v1037
    %v1043 = vmul.f32 1.0, %v1042
    %v1044 = vrcp.pop %v906
    %v1045 = vmul.f32 %v906, %v1044
    %v1046 = vsub.f32 1.0, %v1045
    %v1047 = vmul.f32 %v1044, %v1046
    %v1048 = vadd.f32 %v1044, %v1047
    %vm1049 = vweird.f32 %v906
    %vm1050 = vweird.f32 %v1044
    %vm1051 = vmor %vm1049, %vm1050
    %v1052 = vsel %vm1051, %v1044, %v1048
    %v1053 = vand.u32 2147483647, %v906
    %vm1054 = vcmp.eq.f32.partialorder %v1053, 8.507059e+37
    %v1055 = vand.u32 %v906, 2147483648
    %v1056 = vor.u32 1.1754944e-38, %v1055
    %v1057 = vsel %vm1054, %v1056, %v1052
    %v1058 = vmul.f32 1.0, %v1057
    %v1059 = vrcp.pop %v907
    %v1060 = vmul.f32 %v907, %v1059
    %v1061 = vsub.f32 1.0, %v1060
    %v1062 = vmul.f32 %v1059, %v1061
    %v1063 = vadd.f32 %v1059, %v1062
    %vm1064 = vweird.f32 %v907
    %vm1065 = vweird.f32 %v1059
    %vm1066 = vmor %vm1064, %vm1065
    %v1067 = vsel %vm1066, %v1059, %v1063
    %v1068 = vand.u32 2147483647, %v907
    %vm1069 = vcmp.eq.f32.partialorder %v1068, 8.507059e+37
    %v1070 = vand.u32 %v907, 2147483648
    %v1071 = vor.u32 1.1754944e-38, %v1070
    %v1072 = vsel %vm1069, %v1071, %v1067
    %v1073 = vmul.f32 1.0, %v1072
    %v1074 = vrcp.pop %v908
    %v1075 = vmul.f32 %v908, %v1074
    %v1076 = vsub.f32 1.0, %v1075
    %v1077 = vmul.f32 %v1074, %v1076
    %v1078 = vadd.f32 %v1074, %v1077
    %vm1079 = vweird.f32 %v908
    %vm1080 = vweird.f32 %v1074
    %vm1081 = vmor %vm1079, %vm1080
    %v1082 = vsel %vm1081, %v1074, %v1078
    %v1083 = vand.u32 2147483647, %v908
    %vm1084 = vcmp.eq.f32.partialorder %v1083, 8.507059e+37
    %v1085 = vand.u32 %v908, 2147483648
    %v1086 = vor.u32 1.1754944e-38, %v1085
    %v1087 = vsel %vm1084, %v1086, %v1082
    %v1088 = vmul.f32 1.0, %v1087
    %v1091 = vrot.slane %v423, 3
    %v1092 = vrot.slane %v468, 3
    %vm1095 = vcmask 1041408
    %v1096 = vrot.slane %v423, 6
    %v1097 = vrot.slane %v438, 6
    %v1098 = vsel %vm1095, %v1096, %v1097
    %v1099 = vrot.slane %v468, 6
    %v1100 = vrot.slane %v483, 6
    %v1101 = vsel %vm1095, %v1099, %v1100
    %v1102 = vrot.slane %v438, 1
    %v1103 = vrot.slane %v483, 1
    %v1104 = vrot.slane %v438, 4
    %v1105 = vrot.slane %v483, 4
    %vm1108 = vcmask 1040384
    %v1109 = vrot.slane %v438, 7
    %v1110 = vrot.slane %v453, 7
    %v1111 = vsel %vm1108, %v1109, %v1110
    %v1112 = vrot.slane %v483, 7
    %v1113 = vrot.slane %v498, 7
    %v1114 = vsel %vm1108, %v1112, %v1113
    %v1115 = vrot.slane %v453, 2
    %v1116 = vrot.slane %v498, 2
    %v1117 = vrot.slane %v453, 5
    %v1118 = vrot.slane %v498, 5
    %1119 = vset.pattern.permute.xlu0 0
    %1120 = vperm.xlu0 %1119, %v423
    %v1121 = vpop.permute.xlu0 %1120
    %1122 = vset.pattern.permute.xlu0 0
    %1123 = vperm.xlu0 %1122, %v468
    %v1124 = vpop.permute.xlu0 %1123
    %1125 = vset.pattern.permute.xlu0 0
    %1126 = vperm.xlu0 %1125, %v1091
    %v1127 = vpop.permute.xlu0 %1126
    %1128 = vset.pattern.permute.xlu0 0
    %1129 = vperm.xlu0 %1128, %v1092
    %v1130 = vpop.permute.xlu0 %1129
    %1131 = vset.pattern.permute.xlu0 0
    %1132 = vperm.xlu0 %1131, %v1098
    %v1133 = vpop.permute.xlu0 %1132
    %1134 = vset.pattern.permute.xlu0 0
    %1135 = vperm.xlu0 %1134, %v1101
    %v1136 = vpop.permute.xlu0 %1135
    %1137 = vset.pattern.permute.xlu0 0
    %1138 = vperm.xlu0 %1137, %v1102
    %v1139 = vpop.permute.xlu0 %1138
    %1140 = vset.pattern.permute.xlu0 0
    %1141 = vperm.xlu0 %1140, %v1103
    %v1142 = vpop.permute.xlu0 %1141
    %1143 = vset.pattern.permute.xlu0 0
    %1144 = vperm.xlu0 %1143, %v1104
    %v1145 = vpop.permute.xlu0 %1144
    %1146 = vset.pattern.permute.xlu0 0
    %1147 = vperm.xlu0 %1146, %v1105
    %v1148 = vpop.permute.xlu0 %1147
    %1149 = vset.pattern.permute.xlu0 0
    %1150 = vperm.xlu0 %1149, %v1111
    %v1151 = vpop.permute.xlu0 %1150
    %1152 = vset.pattern.permute.xlu0 0
    %1153 = vperm.xlu0 %1152, %v1114
    %v1154 = vpop.permute.xlu0 %1153
    %1155 = vset.pattern.permute.xlu0 0
    %1156 = vperm.xlu0 %1155, %v1115
    %v1157 = vpop.permute.xlu0 %1156
    %1158 = vset.pattern.permute.xlu0 0
    %1159 = vperm.xlu0 %1158, %v1116
    %v1160 = vpop.permute.xlu0 %1159
    %1161 = vset.pattern.permute.xlu0 0
    %1162 = vperm.xlu0 %1161, %v1117
    %v1163 = vpop.permute.xlu0 %1162
    %1164 = vset.pattern.permute.xlu0 0
    %1165 = vperm.xlu0 %1164, %v1118
    %v1166 = vpop.permute.xlu0 %1165
    %v1167 = vperm.slane %v1121, %v337
    %v1168 = vperm.slane %v1124, %v337
    %v1169 = vperm.slane %v1127, %v337
    %v1170 = vperm.slane %v1130, %v337
    %v1171 = vperm.slane %v1133, %v337
    %v1172 = vperm.slane %v1136, %v337
    %v1173 = vperm.slane %v1139, %v337
    %v1174 = vperm.slane %v1142, %v337
    %v1175 = vperm.slane %v1145, %v337
    %v1176 = vperm.slane %v1148, %v337
    %v1177 = vperm.slane %v1151, %v337
    %v1178 = vperm.slane %v1154, %v337
    %v1179 = vperm.slane %v1157, %v337
    %v1180 = vperm.slane %v1160, %v337
    %v1181 = vperm.slane %v1163, %v337
    %v1182 = vperm.slane %v1166, %v337
    %v1183 = vsel %vm162, %v1168, %v1167
    %v1184 = vsel %vm162, %v1170, %v1169
    %v1185 = vsel %vm162, %v1172, %v1171
    %v1186 = vsel %vm162, %v1174, %v1173
    %v1187 = vsel %vm162, %v1176, %v1175
    %v1188 = vsel %vm162, %v1178, %v1177
    %v1189 = vsel %vm162, %v1180, %v1179
    %v1190 = vsel %vm162, %v1182, %v1181
    %v1199 = vrot.slane %v1185, 4
    %v1200 = vsel %vm211, %v1199, %v1183
    %v1202 = vunpack.c.l.s4 1983009808
    %v1203 = vunpack.c.0.s8 %v1202
    %v1204 = vperm.slane %v1200, %v1203
    %v1205 = vrot.slane %v1186, 4
    %v1206 = vsel %vm211, %v1205, %v1184
    %v1208 = vunpack.c.l.s4 1983009808
    %v1209 = vunpack.c.0.s8 %v1208
    %v1210 = vperm.slane %v1206, %v1209
    %v1211 = vrot.slane %v1189, 4
    %v1212 = vsel %vm211, %v1211, %v1187
    %v1214 = vunpack.c.l.s4 1983009808
    %v1215 = vunpack.c.0.s8 %v1214
    %v1216 = vperm.slane %v1212, %v1215
    %v1217 = vrot.slane %v1190, 4
    %v1218 = vsel %vm211, %v1217, %v1188
    %v1220 = vunpack.c.l.s4 1983009808
    %v1221 = vunpack.c.0.s8 %v1220
    %v1222 = vperm.slane %v1218, %v1221
    %v1223 = vrot.slane %v1210, 4
    %v1224 = vsel %vm211, %v1223, %v1204
    %v1226 = vunpack.c.l.s4 1934713408
    %v1227 = vunpack.c.0.s8 %v1226
    %v1228 = vperm.slane %v1224, %v1227
    %v1229 = vrot.slane %v1222, 4
    %v1230 = vsel %vm211, %v1229, %v1216
    %v1232 = vunpack.c.l.s4 1934713408
    %v1233 = vunpack.c.0.s8 %v1232
    %v1234 = vperm.slane %v1230, %v1233
    %v1235 = vrot.slane %v1234, 4
    %v1236 = vsel %vm211, %v1235, %v1228
    %v1237 = vrot.slane %v1228, 4
    %v1238 = vsel %vm211, %v1234, %v1237
    %v1240 = vperm.slane %v50, 0
    %v1242 = vmul.f32 %v1236, %v1240
    %v1243 = vmul.f32 %v1238, %v1240
    %v1256 = vperm.slane %v923, %v337
    %v1257 = vperm.slane %v938, %v792
    %v1258 = vsel %vm794, %v1257, %v1256
    %v1259 = vperm.slane %v953, %v337
    %v1260 = vperm.slane %v968, %v792
    %v1261 = vsel %vm794, %v1260, %v1259
    %v1262 = vperm.slane %v983, %v337
    %v1263 = vperm.slane %v998, %v792
    %v1264 = vsel %vm794, %v1263, %v1262
    %v1265 = vperm.slane %v1013, %v337
    %v1266 = vperm.slane %v1028, %v792
    %v1267 = vsel %vm794, %v1266, %v1265
    %v1268 = vperm.slane %v1043, %v337
    %v1269 = vperm.slane %v1058, %v792
    %v1270 = vsel %vm794, %v1269, %v1268
    %v1271 = vperm.slane %v1073, %v337
    %v1272 = vperm.slane %v1088, %v792
    %v1273 = vsel %vm794, %v1272, %v1271
    %v1274 = vsel %vm340, %v1258, %v1258
    %v1275 = vsel %vm342, %v1258, %v1274
    %v1276 = vsel %vm344, %v1258, %v1275
    %v1277 = vsel %vm346, %v1258, %v1276
    %v1278 = vsel %vm348, %v1258, %v1277
    %v1279 = vsel %vm350, %v1258, %v1278
    %v1280 = vsel %vm340, %v1261, %v1261
    %v1281 = vsel %vm342, %v1261, %v1280
    %v1282 = vsel %vm344, %v1261, %v1281
    %v1283 = vsel %vm346, %v1261, %v1282
    %v1284 = vsel %vm348, %v1261, %v1283
    %v1285 = vsel %vm350, %v1261, %v1284
    %v1286 = vsel %vm340, %v1264, %v1264
    %v1287 = vsel %vm342, %v1264, %v1286
    %v1288 = vsel %vm344, %v1264, %v1287
    %v1289 = vsel %vm346, %v1264, %v1288
    %v1290 = vsel %vm348, %v1264, %v1289
    %v1291 = vsel %vm350, %v1264, %v1290
    %v1292 = vsel %vm340, %v1267, %v1267
    %v1293 = vsel %vm342, %v1267, %v1292
    %v1294 = vsel %vm344, %v1267, %v1293
    %v1295 = vsel %vm346, %v1267, %v1294
    %v1296 = vsel %vm348, %v1267, %v1295
    %v1297 = vsel %vm350, %v1267, %v1296
    %v1298 = vsel %vm340, %v1270, %v1270
    %v1299 = vsel %vm342, %v1270, %v1298
    %v1300 = vsel %vm344, %v1270, %v1299
    %v1301 = vsel %vm346, %v1270, %v1300
    %v1302 = vsel %vm348, %v1270, %v1301
    %v1303 = vsel %vm350, %v1270, %v1302
    %v1304 = vsel %vm340, %v1273, %v1273
    %v1305 = vsel %vm342, %v1273, %v1304
    %v1306 = vsel %vm344, %v1273, %v1305
    %v1307 = vsel %vm346, %v1273, %v1306
    %v1308 = vsel %vm348, %v1273, %v1307
    %v1309 = vsel %vm350, %v1273, %v1308
    %v1316 = vmul.f32 %v615, %v1279
    %v1317 = vmul.f32 %v630, %v1279
    %v1318 = vmul.f32 %v645, %v1285
    %v1319 = vmul.f32 %v660, %v1285
    %v1320 = vmul.f32 %v675, %v1291
    %v1321 = vmul.f32 %v690, %v1291
    %v1322 = vmul.f32 %v705, %v1297
    %v1323 = vmul.f32 %v720, %v1297
    %v1324 = vmul.f32 %v735, %v1303
    %v1325 = vmul.f32 %v750, %v1303
    %v1326 = vmul.f32 %v765, %v1309
    %v1327 = vmul.f32 %v780, %v1309
    %v1328 = vrot.slane %v1320, 4
    %v1329 = vsel %vm211, %v1328, %v1316
    %v1330 = vrot.slane %v1316, 4
    %v1331 = vsel %vm211, %v1320, %v1330
    %v1333 = vunpack.c.l.s4 1983009808
    %v1334 = vunpack.c.0.s8 %v1333
    %v1335 = vperm.slane %v1329, %v1334
    %v1337 = vunpack.c.l.s4 1983009808
    %v1338 = vunpack.c.0.s8 %v1337
    %v1339 = vperm.slane %v1331, %v1338
    %v1340 = vrot.slane %v1318, 4
    %v1341 = vsel %vm211, 0.0, %v1340
    %v1343 = vunpack.c.l.s4 1983009808
    %v1344 = vunpack.c.0.s8 %v1343
    %v1345 = vperm.slane %v1318, %v1344
    %v1347 = vunpack.c.l.s4 1983009808
    %v1348 = vunpack.c.0.s8 %v1347
    %v1349 = vperm.slane %v1341, %v1348
    %v1350 = vrot.slane %v1345, 4
    %v1351 = vsel %vm211, %v1350, %v1335
    %v1352 = vrot.slane %v1335, 4
    %v1353 = vsel %vm211, %v1345, %v1352
    %v1355 = vunpack.c.l.s4 1934713408
    %v1356 = vunpack.c.0.s8 %v1355
    %v1357 = vperm.slane %v1351, %v1356
    %v1359 = vunpack.c.l.s4 1934713408
    %v1360 = vunpack.c.0.s8 %v1359
    %v1361 = vperm.slane %v1353, %v1360
    %v1362 = vrot.slane %v1349, 4
    %v1363 = vsel %vm211, %v1362, %v1339
    %v1364 = vrot.slane %v1339, 4
    %v1365 = vsel %vm211, %v1349, %v1364
    %v1367 = vunpack.c.l.s4 1934713408
    %v1368 = vunpack.c.0.s8 %v1367
    %v1369 = vperm.slane %v1363, %v1368
    %v1371 = vunpack.c.l.s4 1934713408
    %v1372 = vunpack.c.0.s8 %v1371
    %v1373 = vperm.slane %v1365, %v1372
    %v1374 = vrot.slane %v1357, 4
    %v1375 = vsel %vm211, 0.0, %v1374
    %v1376 = vrot.slane %v1361, 4
    %v1377 = vsel %vm211, 0.0, %v1376
    %v1378 = vrot.slane %v1369, 4
    %v1379 = vsel %vm211, 0.0, %v1378
    %v1380 = vrot.slane %v1373, 4
    %v1381 = vsel %vm211, 0.0, %v1380
    %v1382 = vrot.slane %v1321, 4
    %v1383 = vsel %vm211, %v1382, %v1317
    %v1384 = vrot.slane %v1317, 4
    %v1385 = vsel %vm211, %v1321, %v1384
    %v1387 = vunpack.c.l.s4 1983009808
    %v1388 = vunpack.c.0.s8 %v1387
    %v1389 = vperm.slane %v1383, %v1388
    %v1391 = vunpack.c.l.s4 1983009808
    %v1392 = vunpack.c.0.s8 %v1391
    %v1393 = vperm.slane %v1385, %v1392
    %v1394 = vrot.slane %v1319, 4
    %v1395 = vsel %vm211, 0.0, %v1394
    %v1397 = vunpack.c.l.s4 1983009808
    %v1398 = vunpack.c.0.s8 %v1397
    %v1399 = vperm.slane %v1319, %v1398
    %v1401 = vunpack.c.l.s4 1983009808
    %v1402 = vunpack.c.0.s8 %v1401
    %v1403 = vperm.slane %v1395, %v1402
    %v1404 = vrot.slane %v1399, 4
    %v1405 = vsel %vm211, %v1404, %v1389
    %v1406 = vrot.slane %v1389, 4
    %v1407 = vsel %vm211, %v1399, %v1406
    %v1409 = vunpack.c.l.s4 1934713408
    %v1410 = vunpack.c.0.s8 %v1409
    %v1411 = vperm.slane %v1405, %v1410
    %v1413 = vunpack.c.l.s4 1934713408
    %v1414 = vunpack.c.0.s8 %v1413
    %v1415 = vperm.slane %v1407, %v1414
    %v1416 = vrot.slane %v1403, 4
    %v1417 = vsel %vm211, %v1416, %v1393
    %v1418 = vrot.slane %v1393, 4
    %v1419 = vsel %vm211, %v1403, %v1418
    %v1421 = vunpack.c.l.s4 1934713408
    %v1422 = vunpack.c.0.s8 %v1421
    %v1423 = vperm.slane %v1417, %v1422
    %v1425 = vunpack.c.l.s4 1934713408
    %v1426 = vunpack.c.0.s8 %v1425
    %v1427 = vperm.slane %v1419, %v1426
    %v1428 = vrot.slane %v1411, 4
    %v1429 = vsel %vm211, 0.0, %v1428
    %v1430 = vrot.slane %v1415, 4
    %v1431 = vsel %vm211, 0.0, %v1430
    %v1432 = vrot.slane %v1423, 4
    %v1433 = vsel %vm211, 0.0, %v1432
    %v1434 = vrot.slane %v1427, 4
    %v1435 = vsel %vm211, 0.0, %v1434
    %v1436 = vrot.slane %v1326, 4
    %v1437 = vsel %vm211, %v1436, %v1322
    %v1438 = vrot.slane %v1322, 4
    %v1439 = vsel %vm211, %v1326, %v1438
    %v1441 = vunpack.c.l.s4 1983009808
    %v1442 = vunpack.c.0.s8 %v1441
    %v1443 = vperm.slane %v1437, %v1442
    %v1445 = vunpack.c.l.s4 1983009808
    %v1446 = vunpack.c.0.s8 %v1445
    %v1447 = vperm.slane %v1439, %v1446
    %v1448 = vrot.slane %v1324, 4
    %v1449 = vsel %vm211, 0.0, %v1448
    %v1451 = vunpack.c.l.s4 1983009808
    %v1452 = vunpack.c.0.s8 %v1451
    %v1453 = vperm.slane %v1324, %v1452
    %v1455 = vunpack.c.l.s4 1983009808
    %v1456 = vunpack.c.0.s8 %v1455
    %v1457 = vperm.slane %v1449, %v1456
    %v1458 = vrot.slane %v1453, 4
    %v1459 = vsel %vm211, %v1458, %v1443
    %v1460 = vrot.slane %v1443, 4
    %v1461 = vsel %vm211, %v1453, %v1460
    %v1463 = vunpack.c.l.s4 1934713408
    %v1464 = vunpack.c.0.s8 %v1463
    %v1465 = vperm.slane %v1459, %v1464
    %v1467 = vunpack.c.l.s4 1934713408
    %v1468 = vunpack.c.0.s8 %v1467
    %v1469 = vperm.slane %v1461, %v1468
    %v1470 = vrot.slane %v1457, 4
    %v1471 = vsel %vm211, %v1470, %v1447
    %v1472 = vrot.slane %v1447, 4
    %v1473 = vsel %vm211, %v1457, %v1472
    %v1475 = vunpack.c.l.s4 1934713408
    %v1476 = vunpack.c.0.s8 %v1475
    %v1477 = vperm.slane %v1471, %v1476
    %v1479 = vunpack.c.l.s4 1934713408
    %v1480 = vunpack.c.0.s8 %v1479
    %v1481 = vperm.slane %v1473, %v1480
    %v1482 = vrot.slane %v1465, 4
    %v1483 = vsel %vm211, 0.0, %v1482
    %v1484 = vrot.slane %v1469, 4
    %v1485 = vsel %vm211, 0.0, %v1484
    %v1486 = vrot.slane %v1477, 4
    %v1487 = vsel %vm211, 0.0, %v1486
    %v1488 = vrot.slane %v1481, 4
    %v1489 = vsel %vm211, 0.0, %v1488
    %v1490 = vrot.slane %v1327, 4
    %v1491 = vsel %vm211, %v1490, %v1323
    %v1492 = vrot.slane %v1323, 4
    %v1493 = vsel %vm211, %v1327, %v1492
    %v1495 = vunpack.c.l.s4 1983009808
    %v1496 = vunpack.c.0.s8 %v1495
    %v1497 = vperm.slane %v1491, %v1496
    %v1499 = vunpack.c.l.s4 1983009808
    %v1500 = vunpack.c.0.s8 %v1499
    %v1501 = vperm.slane %v1493, %v1500
    %v1502 = vrot.slane %v1325, 4
    %v1503 = vsel %vm211, 0.0, %v1502
    %v1505 = vunpack.c.l.s4 1983009808
    %v1506 = vunpack.c.0.s8 %v1505
    %v1507 = vperm.slane %v1325, %v1506
    %v1509 = vunpack.c.l.s4 1983009808
    %v1510 = vunpack.c.0.s8 %v1509
    %v1511 = vperm.slane %v1503, %v1510
    %v1512 = vrot.slane %v1507, 4
    %v1513 = vsel %vm211, %v1512, %v1497
    %v1514 = vrot.slane %v1497, 4
    %v1515 = vsel %vm211, %v1507, %v1514
    %v1517 = vunpack.c.l.s4 1934713408
    %v1518 = vunpack.c.0.s8 %v1517
    %v1519 = vperm.slane %v1513, %v1518
    %v1521 = vunpack.c.l.s4 1934713408
    %v1522 = vunpack.c.0.s8 %v1521
    %v1523 = vperm.slane %v1515, %v1522
    %v1524 = vrot.slane %v1511, 4
    %v1525 = vsel %vm211, %v1524, %v1501
    %v1526 = vrot.slane %v1501, 4
    %v1527 = vsel %vm211, %v1511, %v1526
    %v1529 = vunpack.c.l.s4 1934713408
    %v1530 = vunpack.c.0.s8 %v1529
    %v1531 = vperm.slane %v1525, %v1530
    %v1533 = vunpack.c.l.s4 1934713408
    %v1534 = vunpack.c.0.s8 %v1533
    %v1535 = vperm.slane %v1527, %v1534
    %v1536 = vrot.slane %v1519, 4
    %v1537 = vsel %vm211, 0.0, %v1536
    %v1538 = vrot.slane %v1523, 4
    %v1539 = vsel %vm211, 0.0, %v1538
    %v1540 = vrot.slane %v1531, 4
    %v1541 = vsel %vm211, 0.0, %v1540
    %v1542 = vrot.slane %v1535, 4
    %v1543 = vsel %vm211, 0.0, %v1542
    %1546 = vrot.lane.b32.xlu0 %v1375, 16
    %v1547 = vpop.permute.xlu0 %1546
    %1548 = vrot.lane.b32.xlu0 %v1483, 16
    %v1549 = vpop.permute.xlu0 %1548
    %1554 = vrot.lane.b32.xlu0 %v1361, 32
    %v1555 = vpop.permute.xlu0 %1554
    %1556 = vrot.lane.b32.xlu0 %v1469, 32
    %v1557 = vpop.permute.xlu0 %1556
    %1562 = vrot.lane.b32.xlu0 %v1377, 48
    %v1563 = vpop.permute.xlu0 %1562
    %1564 = vrot.lane.b32.xlu0 %v1485, 48
    %v1565 = vpop.permute.xlu0 %1564
    %1570 = vrot.lane.b32.xlu0 %v1369, 64
    %v1571 = vpop.permute.xlu0 %1570
    %1572 = vrot.lane.b32.xlu0 %v1477, 64
    %v1573 = vpop.permute.xlu0 %1572
    %1578 = vrot.lane.b32.xlu0 %v1379, 80
    %v1579 = vpop.permute.xlu0 %1578
    %1580 = vrot.lane.b32.xlu0 %v1487, 80
    %v1581 = vpop.permute.xlu0 %1580
    %1586 = vrot.lane.b32.xlu0 %v1373, 96
    %v1587 = vpop.permute.xlu0 %1586
    %1588 = vrot.lane.b32.xlu0 %v1481, 96
    %v1589 = vpop.permute.xlu0 %1588
    %1594 = vrot.lane.b32.xlu0 %v1381, 112
    %v1595 = vpop.permute.xlu0 %1594
    %1596 = vrot.lane.b32.xlu0 %v1489, 112
    %v1597 = vpop.permute.xlu0 %1596
    %1602 = vrot.lane.b32.xlu0 %v1429, 16
    %v1603 = vpop.permute.xlu0 %1602
    %1604 = vrot.lane.b32.xlu0 %v1537, 16
    %v1605 = vpop.permute.xlu0 %1604
    %1610 = vrot.lane.b32.xlu0 %v1415, 32
    %v1611 = vpop.permute.xlu0 %1610
    %1612 = vrot.lane.b32.xlu0 %v1523, 32
    %v1613 = vpop.permute.xlu0 %1612
    %1618 = vrot.lane.b32.xlu0 %v1431, 48
    %v1619 = vpop.permute.xlu0 %1618
    %1620 = vrot.lane.b32.xlu0 %v1539, 48
    %v1621 = vpop.permute.xlu0 %1620
    %1626 = vrot.lane.b32.xlu0 %v1423, 64
    %v1627 = vpop.permute.xlu0 %1626
    %1628 = vrot.lane.b32.xlu0 %v1531, 64
    %v1629 = vpop.permute.xlu0 %1628
    %1634 = vrot.lane.b32.xlu0 %v1433, 80
    %v1635 = vpop.permute.xlu0 %1634
    %1636 = vrot.lane.b32.xlu0 %v1541, 80
    %v1637 = vpop.permute.xlu0 %1636
    %1642 = vrot.lane.b32.xlu0 %v1427, 96
    %v1643 = vpop.permute.xlu0 %1642
    %1644 = vrot.lane.b32.xlu0 %v1535, 96
    %v1645 = vpop.permute.xlu0 %1644
    %1650 = vrot.lane.b32.xlu0 %v1435, 112
    %v1651 = vpop.permute.xlu0 %1650
    %1652 = vrot.lane.b32.xlu0 %v1543, 112
    %v1653 = vpop.permute.xlu0 %1652
    %v1656 = vsel %vm291, %v1357, %v1547
    %v1657 = vsel %vm291, %v1465, %v1549
    %vm1658 = vcmask 261120
    %v1659 = vsel %vm1658, %v1656, %v1555
    %v1660 = vsel %vm1658, %v1657, %v1557
    %vm1661 = vcmask 392192
    %v1662 = vsel %vm1661, %v1659, %v1563
    %v1663 = vsel %vm1661, %v1660, %v1565
    %vm1664 = vcmask 523264
    %v1665 = vsel %vm1664, %v1662, %v1571
    %v1666 = vsel %vm1664, %v1663, %v1573
    %vm1667 = vcmask 654336
    %v1668 = vsel %vm1667, %v1665, %v1579
    %v1669 = vsel %vm1667, %v1666, %v1581
    %vm1670 = vcmask 785408
    %v1671 = vsel %vm1670, %v1668, %v1587
    %v1672 = vsel %vm1670, %v1669, %v1589
    %vm1673 = vcmask 916480
    %v1674 = vsel %vm1673, %v1671, %v1595
    %v1675 = vsel %vm1673, %v1672, %v1597
    %v1676 = vsel %vm291, %v1411, %v1603
    %v1677 = vsel %vm291, %v1519, %v1605
    %v1678 = vsel %vm1658, %v1676, %v1611
    %v1679 = vsel %vm1658, %v1677, %v1613
    %v1680 = vsel %vm1661, %v1678, %v1619
    %v1681 = vsel %vm1661, %v1679, %v1621
    %v1682 = vsel %vm1664, %v1680, %v1627
    %v1683 = vsel %vm1664, %v1681, %v1629
    %v1684 = vsel %vm1667, %v1682, %v1635
    %v1685 = vsel %vm1667, %v1683, %v1637
    %v1686 = vsel %vm1670, %v1684, %v1643
    %v1687 = vsel %vm1670, %v1685, %v1645
    %v1688 = vsel %vm1673, %v1686, %v1651
    %v1689 = vsel %vm1673, %v1687, %v1653
    %1691 = vset.pattern.permute.xlu0 0
    %1692 = vperm.xlu0 %1691, %v1242
    %v1693 = vpop.permute.xlu0 %1692
    %1696 = vset.pattern.permute.xlu0 0
    %1697 = vperm.xlu0 %1696, %v1243
    %v1698 = vpop.permute.xlu0 %1697
    %v1700 = vperm.slane %v1674, 0
    %v1701 = vperm.slane %v1688, 0
    %v1702 = vperm.slane %v1675, 0
    %v1703 = vperm.slane %v1689, 0
    %v1704 = vmul.f32 %v1693, %v1700
    %v1705 = vmul.f32 %v1693, %v1701
    %v1706 = vmul.f32 %v1698, %v1702
    %v1707 = vmul.f32 %v1698, %v1703
    %1708 = vset.pattern.permute.xlu0 1
    %1709 = vperm.xlu0 %1708, %v1242
    %v1710 = vpop.permute.xlu0 %1709
    %1712 = vset.pattern.permute.xlu0 1
    %1713 = vperm.xlu0 %1712, %v1243
    %v1714 = vpop.permute.xlu0 %1713
    %v1716 = vperm.slane %v1674, 1
    %v1717 = vperm.slane %v1688, 1
    %v1718 = vperm.slane %v1675, 1
    %v1719 = vperm.slane %v1689, 1
    %v1720 = vmul.f32 %v1710, %v1716
    %v1721 = vmul.f32 %v1710, %v1717
    %v1722 = vmul.f32 %v1714, %v1718
    %v1723 = vmul.f32 %v1714, %v1719
    %v1724 = vadd.f32 %v1704, %v1720
    %v1725 = vadd.f32 %v1705, %v1721
    %v1726 = vadd.f32 %v1706, %v1722
    %v1727 = vadd.f32 %v1707, %v1723
    %1728 = vset.pattern.permute.xlu0 2
    %1729 = vperm.xlu0 %1728, %v1242
    %v1730 = vpop.permute.xlu0 %1729
    %1732 = vset.pattern.permute.xlu0 2
    %1733 = vperm.xlu0 %1732, %v1243
    %v1734 = vpop.permute.xlu0 %1733
    %v1736 = vperm.slane %v1674, 2
    %v1737 = vperm.slane %v1688, 2
    %v1738 = vperm.slane %v1675, 2
    %v1739 = vperm.slane %v1689, 2
    %v1740 = vmul.f32 %v1730, %v1736
    %v1741 = vmul.f32 %v1730, %v1737
    %v1742 = vmul.f32 %v1734, %v1738
    %v1743 = vmul.f32 %v1734, %v1739
    %v1744 = vadd.f32 %v1724, %v1740
    %v1745 = vadd.f32 %v1725, %v1741
    %v1746 = vadd.f32 %v1726, %v1742
    %v1747 = vadd.f32 %v1727, %v1743
    %v1748 = vmul.f32 %v21, %v1744
    %v1749 = vmul.f32 %v22, %v1745
    %v1750 = vmul.f32 %v23, %v1746
    %v1751 = vmul.f32 %v24, %v1747
    %v1752 = vmax.f32 %v1748, 0.0
    %v1753 = vmax.f32 %v1749, 0.0
    %v1754 = vmax.f32 %v1750, 0.0
    %v1755 = vmax.f32 %v1751, 0.0
    %v1756 = vadd.f32 %v21, %v1752
    %v1757 = vadd.f32 %v22, %v1753
    %v1758 = vadd.f32 %v23, %v1754
    %v1759 = vadd.f32 %v24, %v1755
    %1760 = vst [vmem:[#allocation2] sm:$0xff] %v1756
    %1761 = vst [vmem:[#allocation2 + $0x8] sm:$0xff] %v1757
    %1762 = vst [vmem:[#allocation2 + $0x10] sm:$0xff] %v1758
    %1763 = vst [vmem:[#allocation2 + $0x18] sm:$0xff] %v1759
    // Predicated region
    $region22: #{tpu_custom_call.1} parent=1 // pred_check
      _
    $region23: #{tpu_custom_call.1} parent=1 // pred_check_branch
      %1765 = sbr.rel (0) target = $region25
    $region24: #{tpu_custom_call.1} parent=1 // pred_region
      %1767 = vsyncadd [#allocation3], 0
      %s1768 = sshll.u32 [#allocation2], 4
      %s1769 = int_to_ptr.vmem [resolvable:$true] %s1768
      %s1770 = sshll.u32 %s5, 4
      %s1771 = int_to_ptr.hbm [resolvable:$true] %s1770
      %1776 = dma.vmem_to_hbm [thread:$0]  %s1769, 512, %s1771, [#allocation3], 256, 256, 16
    $region25: #{tpu_custom_call.1} parent=1 // pred_fallthru
      _
    // Predicated region
    $region26: #{tpu_custom_call.1} parent=1 // pred_check
      _
    $region27: #{tpu_custom_call.1} parent=1 // pred_check_branch
      %1778 = sbr.rel (0) target = $region29
    $region28: #{tpu_custom_call.1} parent=1 // pred_region
      %1780 = dma.done [#allocation3], 512
    $region29: #{tpu_custom_call.1} parent=1 // pred_fallthru
      _
    %1781 = vsyncpa [#allocation3], 1

</llo_original>
